<compile_context>
chip_gen: v7x
topology: tpu7x:2x2x1
jax: 0.10.0
libtpu: 0.0.40
codegen_flags: <defaults>
</compile_context>

<pallas_src>
import functools

import jax
import jax.numpy as jnp
from jax.experimental import pallas as pl
from jax.experimental.pallas import tpu as pltpu


def _round_up(x, m):
    return ((x + m - 1) // m) * m


def _vmem_capacity_bytes():
    try:
        return int(pltpu.get_tpu_info().vmem_capacity_bytes)
    except Exception:
        return 64 * 1024 * 1024          # conservative (v7x per-TC) fallback


def _default_co_tile(co_pad):
    """256-wide MXU N on v6e/v7x; 128 on v5-class (and older) parts."""
    try:
        kind = jax.devices()[0].device_kind.lower()
    except Exception:
        kind = ""
    if any(v in kind for v in ("v2", "v3", "v4", "v5")):
        return 128
    return 256 if co_pad % 256 == 0 else 128


def _cin_slot(cin, k):
    """Per-tap channel slot on the packed contraction axis.

    Dense (slot == Cin) whenever the tap-copy lane slices can never straddle a
    128-lane vreg boundary at a misaligned offset; otherwise round each tap's slot
    up to a multiple of 128 so every store into the im2col scratch stays aligned.
    """
    kk = k * k
    if kk * cin <= 128 or cin % 128 == 0 or 128 % cin == 0:
        return cin
    return _round_up(cin, 128)


def _working_set_bytes(tile_h, W, cin, co_tile, K, ckk_pad, w_bytes, out_bytes):
    """Per-step VMEM working set (lane-padded, incl. double buffers + scratch)."""
    pad = (K - 1) // 2
    cin_l = _round_up(cin, 128)
    Wp = W + 2 * pad
    s = 2 * tile_h * W * cin_l * 2             # activation row tile (x2 buffers, bf16)
    s += 2 * (2 * pad) * W * cin_l * 2         # halo rows (x2 buffers)
    s += 2 * tile_h * W * co_tile * out_bytes  # output tile (x2 buffers)
    s += (tile_h + 2 * pad) * Wp * cin_l * 2   # stitched zero-padded window scratch
    s += tile_h * W * ckk_pad * 2              # im2col scratch
    s += 2 * tile_h * W * co_tile * 4          # f32 matmul result + epilogue temps
    s += 2 * w_bytes                           # resident (double-buffered) weights
    return s


def _pick_tile_h(H, W, cin, co_tile, K, ckk_pad, w_bytes, out_bytes, *,
                 vmem_budget, prefer_multi_tile):
    fits = [t for t in range(1, H + 1)
            if H % t == 0 and _working_set_bytes(t, W, cin, co_tile, K, ckk_pad,
                                                 w_bytes, out_bytes) <= vmem_budget]
    if not fits:
        return 1                               # degenerate but still correct
    if prefer_multi_tile and H >= 2:
        multi = [t for t in fits if H // t >= 2]   # keep >= 2 row tiles so the
        if multi:                                  # v7x megacore has work to split
            return max(multi)
    return max(fits)


def _qbaseconv_kernel(*refs, K, TILE_H, W, CIN, CIN_SLOT, CKK_PAD):
    """Grid = (N, H//TILE_H, Cout_pad//CO_TILE); one (batch, row-tile, cout-tile) per step.

    refs:
      [0]            x_main : (1, TILE_H, W, CIN)        bf16
      [1 : 1+pad]    x_top  : (1, 1, W, CIN)             bf16  clamped halo rows above
      [1+pad:1+2pad] x_bot  : (1, 1, W, CIN)             bf16  clamped halo rows below
      [1+2pad]       w      : (n_co, CKK_PAD, CO_TILE)   bf16  BN-folded, im2col-packed, resident
      [2+2pad]       b      : (n_co, 1, CO_TILE)         f32   folded BN bias, resident
      [3+2pad]       o      : (1, TILE_H, W, CO_TILE)    out_dtype
      [4+2pad]       xw     : (TILE_H+2pad, W+2pad, CIN) bf16  scratch (zero-padded window)
      [5+2pad]       p      : (TILE_H, W, CKK_PAD)       bf16  scratch (im2col patches)
    """
    pad = (K - 1) // 2
    KK = K * K
    Wp = W + 2 * pad

    x_main = refs[0]
    x_top = refs[1:1 + pad]
    x_bot = refs[1 + pad:1 + 2 * pad]
    w_ref = refs[1 + 2 * pad]
    b_ref = refs[2 + 2 * pad]
    o_ref = refs[3 + 2 * pad]
    xw_ref = refs[4 + 2 * pad]
    p_ref = refs[5 + 2 * pad]

    h = pl.program_id(1)
    co = pl.program_id(2)
    n_rows_total = pl.num_programs(1) * TILE_H
    in_dt = xw_ref.dtype

    # ---- Stitch the zero-padded (TILE_H + 2*pad, W + 2*pad, Cin) window --------
    # SAME padding is produced entirely in-kernel (no jnp.pad HBM pass).
    if pad:
        zeros_col = jnp.zeros((TILE_H + 2 * pad, pad, CIN), in_dt)
        xw_ref[:, 0:pad, :] = zeros_col
        xw_ref[:, pad + W:Wp, :] = zeros_col
    xw_ref[pad:pad + TILE_H, pad:pad + W, :] = x_main[0]
    for r in range(pad):
        # Top halo row r  <-  image row h*TILE_H - pad + r (zero above the image).
        top_ok = h * TILE_H + (r - pad) >= 0

        @pl.when(top_ok)
        def _():
            xw_ref[r, pad:pad + W, :] = x_top[r][0, 0]

        @pl.when(jnp.logical_not(top_ok))
        def _():
            xw_ref[r, pad:pad + W, :] = jnp.zeros((W, CIN), in_dt)

        # Bottom halo row r  <-  image row (h+1)*TILE_H + r (zero below the image).
        bot_ok = (h + 1) * TILE_H + r < n_rows_total

        @pl.when(bot_ok)
        def _():
            xw_ref[pad + TILE_H + r, pad:pad + W, :] = x_bot[r][0, 0]

        @pl.when(jnp.logical_not(bot_ok))
        def _():
            xw_ref[pad + TILE_H + r, pad:pad + W, :] = jnp.zeros((W, CIN), in_dt)

    # ---- im2col: pack all K*K taps onto the contraction (lane) axis ------------
    # Zero the lanes the tap copies below never write (per-tap slot padding and the
    # 128-padded tail) so the padded contraction contributes exactly zero.
    tail0 = KK * CIN_SLOT
    if tail0 < CKK_PAD:
        p_ref[:, :, tail0:CKK_PAD] = jnp.zeros((TILE_H, W, CKK_PAD - tail0), in_dt)
    if CIN_SLOT > CIN:
        gap = jnp.zeros((TILE_H, W, CIN_SLOT - CIN), in_dt)
        for tap in range(KK):
            g0 = tap * CIN_SLOT + CIN
            p_ref[:, :, g0:g0 + (CIN_SLOT - CIN)] = gap
    for kh in range(K):
        for kw in range(K):
            t0 = (kh * K + kw) * CIN_SLOT
            p_ref[:, :, t0:t0 + CIN] = xw_ref[kh:kh + TILE_H, kw:kw + W, :]

    # ---- One fused MXU contraction: (TILE_H, W, K*K*Cin) x (K*K*Cin, CO_TILE) --
    acc = jax.lax.dot_general(
        p_ref[...], w_ref[co],
        dimension_numbers=(((2,), (0,)), ((), ())),
        preferred_element_type=jnp.float32)          # (TILE_H, W, CO_TILE) f32

    # ---- Fused epilogue: folded-BN bias + SiLU (exp + approx reciprocal on EUP) -
    y = acc + b_ref[co][None]                        # (1, 1, CO_TILE) broadcast
    sig = pl.reciprocal(1.0 + jnp.exp(-y), approx=True)
    o_ref[0] = (y * sig).astype(o_ref.dtype)


def qbaseconv_nhwc(x_nhwc, w_hwio, bn_scale, bn_bias, *, ksize=3, tile_h=None,
                   co_tile=None, out_dtype=jnp.bfloat16):
    """x_nhwc: (N, H, W, Cin); w_hwio: (K, K, Cin, Cout). Returns (N, H, W, Cout)."""
    N, H, W, Cin = x_nhwc.shape
    K = ksize
    assert K % 2 == 1, "only odd ksize (SAME padding) is supported"
    # TODO(synk): stride > 1 (downsampling BaseConv variants) is not implemented here.
    pad = (K - 1) // 2
    KK = K * K
    Cout = w_hwio.shape[-1]

    # Fold the BN scale into the conv weights (inference-time constants).
    w_folded = (w_hwio * bn_scale[None, None, None, :]).astype(jnp.float32)

    # Lane-dense output channels; generation-aware CO tile (v6e/v7x MXU N = 256).
    co_pad = _round_up(max(Cout, 128), 128)
    if co_tile is None:
        co_tile = _default_co_tile(co_pad)
    assert co_pad % co_tile == 0, (co_pad, co_tile)
    n_co = co_pad // co_tile

    # im2col weight layout: tap-major contraction axis (tap*cin_slot + ci), padded
    # to a multiple of 128 so the in-kernel matmul needs no remainder masking.
    cin_slot = _cin_slot(Cin, K)
    ckk_pad = _round_up(KK * cin_slot, 128)
    if cin_slot != Cin:
        w_folded = jnp.pad(w_folded, ((0, 0), (0, 0), (0, cin_slot - Cin), (0, 0)))
    w2 = w_folded.reshape(KK * cin_slot, Cout)
    w2 = jnp.pad(w2, ((0, ckk_pad - KK * cin_slot), (0, co_pad - Cout)))
    w2 = w2.reshape(ckk_pad, n_co, co_tile).transpose(1, 0, 2).astype(jnp.bfloat16)

    bias = jnp.pad(bn_bias.astype(jnp.float32), (0, co_pad - Cout))
    b2 = bias.reshape(n_co, 1, co_tile)

    # bf16 activations (MXU operand; halves the activation DMA stream).  SAME
    # padding / halo handling happens inside the kernel - no jnp.pad HBM pass.
    x_bf = x_nhwc.astype(jnp.bfloat16)

    out_bytes = jnp.dtype(out_dtype).itemsize
    vmem_cap = _vmem_capacity_bytes()
    w_bytes = w2.size * 2

    if tile_h is None:
        tile_h = _pick_tile_h(
            H, W, Cin, co_tile, K, ckk_pad, w_bytes, out_bytes,
            vmem_budget=int(0.40 * vmem_cap),
            prefer_multi_tile=(N * n_co == 1))
    assert H % tile_h == 0, (H, tile_h)
    n_h = H // tile_h

    ws = _working_set_bytes(tile_h, W, Cin, co_tile, K, ckk_pad, w_bytes, out_bytes)
    vmem_limit = int(min(max(2 * ws, 32 * 1024 * 1024), vmem_cap))

    kernel = functools.partial(_qbaseconv_kernel, K=K, TILE_H=tile_h, W=W,
                               CIN=Cin, CIN_SLOT=cin_slot, CKK_PAD=ckk_pad)

    # Activation row tile + (K-1) clamped single-row halo views of the same array
    # (out-of-image halos are zeroed in-kernel).  All plain Blocked specs ->
    # auto double-buffered; x blocks don't depend on co -> no re-DMA when only the
    # cout-tile index changes.
    x_main_spec = pl.BlockSpec((1, tile_h, W, Cin), lambda n, h, co: (n, h, 0, 0))
    top_specs = [
        pl.BlockSpec((1, 1, W, Cin),
                     (lambda n, h, co, _r=r:
                      (n, jnp.maximum(h * tile_h - (pad - _r), 0), 0, 0)))
        for r in range(pad)]
    bot_specs = [
        pl.BlockSpec((1, 1, W, Cin),
                     (lambda n, h, co, _r=r:
                      (n, jnp.minimum((h + 1) * tile_h + _r, H - 1), 0, 0)))
        for r in range(pad)]
    # Weights / bias: constant index_map -> DMA'd once, VMEM-resident.
    w_spec = pl.BlockSpec((n_co, ckk_pad, co_tile), lambda n, h, co: (0, 0, 0))
    b_spec = pl.BlockSpec((n_co, 1, co_tile), lambda n, h, co: (0, 0, 0))
    o_spec = pl.BlockSpec((1, tile_h, W, co_tile), lambda n, h, co: (n, h, 0, co))

    flops = 2 * N * H * W * KK * Cin * co_pad
    bytes_accessed = (x_bf.size * 2 + w2.size * 2 + b2.size * 4
                      + N * H * W * co_pad * out_bytes)

    y = pl.pallas_call(
        kernel,
        out_shape=jax.ShapeDtypeStruct((N, H, W, co_pad), out_dtype),
        grid_spec=pltpu.PrefetchScalarGridSpec(
            num_scalar_prefetch=0,
            grid=(N, n_h, n_co),
            in_specs=[x_main_spec, *top_specs, *bot_specs, w_spec, b_spec],
            out_specs=o_spec,
            scratch_shapes=[
                pltpu.VMEM((tile_h + 2 * pad, W + 2 * pad, Cin), jnp.bfloat16),
                pltpu.VMEM((tile_h, W, ckk_pad), jnp.bfloat16),
            ]),
        compiler_params=pltpu.CompilerParams(
            # Every grid step writes a disjoint output tile -> all axes parallel
            # (lets the v7x megacore shard batch / row-tiles / cout-tiles).
            dimension_semantics=("parallel", "parallel", "parallel"),
            vmem_limit_bytes=vmem_limit),
        cost_estimate=pl.CostEstimate(
            flops=flops,
            transcendentals=N * H * W * co_pad,
            bytes_accessed=bytes_accessed),
    )(x_bf, *([x_bf] * (2 * pad)), w2, b2)

    return y[..., :Cout]


def qbaseconv_nchw(x_nchw, w_oihw, gamma, beta, running_mean, running_var,
                   *, eps=1e-5, ksize=3, tile_h=None, co_tile=None,
                   out_dtype=jnp.bfloat16):
    """PyTorch-convention entry point (NCHW in/out): act(norm(conv(x)))."""
    scale = gamma / jnp.sqrt(running_var + eps)
    bias = beta - running_mean * scale
    # TODO(synk): the NCHW<->NHWC transposes are extra HBM passes outside the
    # kernel; a production pipeline should keep activations NHWC end-to-end.
    x_nhwc = jnp.transpose(x_nchw, (0, 2, 3, 1))
    w_hwio = jnp.transpose(w_oihw, (2, 3, 1, 0))
    y_nhwc = qbaseconv_nhwc(x_nhwc, w_hwio, scale, bias, ksize=ksize,
                            tile_h=tile_h, co_tile=co_tile, out_dtype=out_dtype)
    return jnp.transpose(y_nhwc, (0, 3, 1, 2))


def _reference_nchw(x_nchw, w_oihw, gamma, beta, running_mean, running_var,
                    *, eps=1e-5, out_dtype=jnp.bfloat16):
    """Pure-JAX reference (Conv2d pad=1/stride=1/bias=False + BN(inference) + SiLU),
    mirroring the kernel's bf16 operand / bf16 output rounding so the comparison
    isolates kernel math."""
    scale = gamma / jnp.sqrt(running_var + eps)
    bias = beta - running_mean * scale
    w_folded = w_oihw * scale[:, None, None, None]
    x_q = x_nchw.astype(jnp.bfloat16).astype(jnp.float32)
    w_q = w_folded.astype(jnp.bfloat16).astype(jnp.float32)
    y = jax.lax.conv_general_dilated(
        x_q, w_q, window_strides=(1, 1), padding="SAME",
        dimension_numbers=("NCHW", "OIHW", "NCHW"))
    y = y + bias[None, :, None, None]
    y = y * jax.nn.sigmoid(y)
    return y.astype(out_dtype).astype(jnp.float32)


if __name__ == "__main__":
    key = jax.random.PRNGKey(0)
    k_x, k_w, k_g, k_b, k_m, k_v = jax.random.split(key, 6)

    N, Cin, H, W = 2, 4, 16, 16
    Cout, K = 8, 3

    x = jax.random.normal(k_x, (N, Cin, H, W), dtype=jnp.float32)
    w = jax.random.normal(k_w, (Cout, Cin, K, K), dtype=jnp.float32) * 0.1
    gamma = 1.0 + 0.1 * jax.random.normal(k_g, (Cout,), dtype=jnp.float32)
    beta = 0.1 * jax.random.normal(k_b, (Cout,), dtype=jnp.float32)
    running_mean = 0.1 * jax.random.normal(k_m, (Cout,), dtype=jnp.float32)
    running_var = jnp.abs(1.0 + 0.1 * jax.random.normal(k_v, (Cout,), dtype=jnp.float32))

    ref = _reference_nchw(x, w, gamma, beta, running_mean, running_var)

    # tile_h=8 -> two row tiles per image: exercises the in-kernel top-zero /
    # cross-tile / bottom-zero halo paths.
    out = qbaseconv_nchw(x, w, gamma, beta, running_mean, running_var, tile_h=8)
    out = jax.block_until_ready(out)
    assert out.shape == (N, Cout, H, W)
    out_f = out.astype(jnp.float32)
    assert bool(jnp.all(jnp.isfinite(out_f)))
    err = float(jnp.max(jnp.abs(out_f - ref)))
    assert jnp.allclose(out_f, ref, atol=3e-2, rtol=3e-2), \
        "mismatch vs JAX reference: max abs err = %f" % err

    # Auto tile_h / co_tile / VMEM-budget path.
    out2 = jax.block_until_ready(
        qbaseconv_nchw(x, w, gamma, beta, running_mean, running_var))
    out2_f = out2.astype(jnp.float32)
    err2 = float(jnp.max(jnp.abs(out2_f - ref)))
    assert jnp.allclose(out2_f, ref, atol=3e-2, rtol=3e-2), \
        "mismatch vs JAX reference (auto tiling): max abs err = %f" % err2

    print("KERNEL_OK")
</pallas_src>

<mosaic_0001>
module attributes {stable_mosaic.version = 11 : i64} {
  func.func @_qbaseconv_kernel(%arg0: i32, %arg1: i32, %arg2: i32, %arg3: memref<1x8x16x4xbf16, #tpu.memory_space<vmem>>, %arg4: memref<1x1x16x4xbf16, #tpu.memory_space<vmem>>, %arg5: memref<1x1x16x4xbf16, #tpu.memory_space<vmem>>, %arg6: memref<1x128x128xbf16, #tpu.memory_space<vmem>>, %arg7: memref<1x1x128xf32, #tpu.memory_space<vmem>>, %arg8: memref<1x8x16x128xbf16, #tpu.memory_space<vmem>>, %arg9: memref<10x18x4xbf16, #tpu.memory_space<vmem>>, %arg10: memref<8x16x128xbf16, #tpu.memory_space<vmem>>) attributes {dimension_semantics = [#tpu.dimension_semantics<parallel>, #tpu.dimension_semantics<parallel>, #tpu.dimension_semantics<parallel>], iteration_bounds = array<i64: 2, 2, 1>, scalar_prefetch = 0 : i64, scratch_operands = 2 : i64, tpu.core_type = #tpu.core_type<tc>, window_params = [{transform_indices = @transform_0, window_bounds = array<i64: 1, 8, 16, 4>}, {transform_indices = @transform_1, window_bounds = array<i64: 1, 1, 16, 4>}, {transform_indices = @transform_2, window_bounds = array<i64: 1, 1, 16, 4>}, {pipeline_mode = #tpu.pipeline_mode<synchronous>, transform_indices = @transform_3, window_bounds = array<i64: 1, 128, 128>}, {pipeline_mode = #tpu.pipeline_mode<synchronous>, transform_indices = @transform_4, window_bounds = array<i64: 1, 1, 128>}, {transform_indices = @transform_5, window_bounds = array<i64: 1, 8, 16, 128>}]} {
    %cst = arith.constant 0.000000e+00 : bf16
    %0 = vector.broadcast %cst : bf16 to vector<10x1x4xbf16>
    %c0 = arith.constant 0 : index
    %c0_0 = arith.constant 0 : index
    %c0_1 = arith.constant 0 : index
    %1 = vector.load %arg9[%c0, %c0_0, %c0_1] : memref<10x18x4xbf16, #tpu.memory_space<vmem>>, vector<10x1x4xbf16>
    tpu.vector_store %arg9[%c0, %c0_0, %c0_1], %0 {strides = array<i32>} : memref<10x18x4xbf16, #tpu.memory_space<vmem>>, vector<10x1x4xbf16>,
    %c0_2 = arith.constant 0 : index
    %c17 = arith.constant 17 : index
    %c0_3 = arith.constant 0 : index
    %2 = vector.load %arg9[%c0_2, %c17, %c0_3] : memref<10x18x4xbf16, #tpu.memory_space<vmem>>, vector<10x1x4xbf16>
    tpu.vector_store %arg9[%c0_2, %c17, %c0_3], %0 {strides = array<i32>} : memref<10x18x4xbf16, #tpu.memory_space<vmem>>, vector<10x1x4xbf16>,
    %c0_4 = arith.constant 0 : index
    %c0_5 = arith.constant 0 : index
    %c0_6 = arith.constant 0 : index
    %c0_7 = arith.constant 0 : index
    %3 = vector.load %arg3[%c0_4, %c0_5, %c0_6, %c0_7] : memref<1x8x16x4xbf16, #tpu.memory_space<vmem>>, vector<1x8x16x4xbf16>
    %4 = vector.shape_cast %3 : vector<1x8x16x4xbf16> to vector<8x16x4xbf16>
    %c1 = arith.constant 1 : index
    %c1_8 = arith.constant 1 : index
    %c0_9 = arith.constant 0 : index
    %5 = vector.load %arg9[%c1, %c1_8, %c0_9] : memref<10x18x4xbf16, #tpu.memory_space<vmem>>, vector<8x16x4xbf16>
    tpu.vector_store %arg9[%c1, %c1_8, %c0_9], %4 {strides = array<i32>} : memref<10x18x4xbf16, #tpu.memory_space<vmem>>, vector<8x16x4xbf16>,
    %c8_i32 = arith.constant 8 : i32
    %6 = arith.muli %arg1, %c8_i32 : i32
    %c-1_i32 = arith.constant -1 : i32
    %7 = arith.addi %6, %c-1_i32 : i32
    %c0_i32 = arith.constant 0 : i32
    %8 = arith.cmpi sge, %7, %c0_i32 : i32
    %9 = arith.extui %8 : i1 to i32
    %c0_i32_10 = arith.constant 0 : i32
    %10 = arith.cmpi ne, %9, %c0_i32_10 : i32
    scf.if %10 {
      %c0_79 = arith.constant 0 : index
      %c0_80 = arith.constant 0 : index
      %c0_81 = arith.constant 0 : index
      %c0_82 = arith.constant 0 : index
      %65 = vector.load %arg4[%c0_79, %c0_80, %c0_81, %c0_82] : memref<1x1x16x4xbf16, #tpu.memory_space<vmem>>, vector<1x1x16x4xbf16>
      %66 = vector.shape_cast %65 : vector<1x1x16x4xbf16> to vector<16x4xbf16>
      %c0_83 = arith.constant 0 : index
      %c1_84 = arith.constant 1 : index
      %c0_85 = arith.constant 0 : index
      %67 = vector.load %arg9[%c0_83, %c1_84, %c0_85] : memref<10x18x4xbf16, #tpu.memory_space<vmem>>, vector<1x16x4xbf16>
      %68 = vector.shape_cast %67 : vector<1x16x4xbf16> to vector<16x4xbf16>
      %69 = vector.shape_cast %66 : vector<16x4xbf16> to vector<1x16x4xbf16>
      tpu.vector_store %arg9[%c0_83, %c1_84, %c0_85], %69 {strides = array<i32>} : memref<10x18x4xbf16, #tpu.memory_space<vmem>>, vector<1x16x4xbf16>,
    } else {
    }
    %true = arith.constant true
    %11 = arith.xori %8, %true : i1
    %12 = arith.extui %11 : i1 to i32
    %c0_i32_11 = arith.constant 0 : i32
    %13 = arith.cmpi ne, %12, %c0_i32_11 : i32
    scf.if %13 {
      %cst_79 = arith.constant 0.000000e+00 : bf16
      %65 = vector.broadcast %cst_79 : bf16 to vector<16x4xbf16>
      %c0_80 = arith.constant 0 : index
      %c1_81 = arith.constant 1 : index
      %c0_82 = arith.constant 0 : index
      %66 = vector.load %arg9[%c0_80, %c1_81, %c0_82] : memref<10x18x4xbf16, #tpu.memory_space<vmem>>, vector<1x16x4xbf16>
      %67 = vector.shape_cast %66 : vector<1x16x4xbf16> to vector<16x4xbf16>
      %68 = vector.shape_cast %65 : vector<16x4xbf16> to vector<1x16x4xbf16>
      tpu.vector_store %arg9[%c0_80, %c1_81, %c0_82], %68 {strides = array<i32>} : memref<10x18x4xbf16, #tpu.memory_space<vmem>>, vector<1x16x4xbf16>,
    } else {
    }
    %c1_i32 = arith.constant 1 : i32
    %14 = arith.addi %arg1, %c1_i32 : i32
    %c8_i32_12 = arith.constant 8 : i32
    %15 = arith.muli %14, %c8_i32_12 : i32
    %c0_i32_13 = arith.constant 0 : i32
    %16 = arith.addi %15, %c0_i32_13 : i32
    %c16_i32 = arith.constant 16 : i32
    %17 = arith.cmpi slt, %16, %c16_i32 : i32
    %18 = arith.extui %17 : i1 to i32
    %c0_i32_14 = arith.constant 0 : i32
    %19 = arith.cmpi ne, %18, %c0_i32_14 : i32
    scf.if %19 {
      %c0_79 = arith.constant 0 : index
      %c0_80 = arith.constant 0 : index
      %c0_81 = arith.constant 0 : index
      %c0_82 = arith.constant 0 : index
      %65 = vector.load %arg5[%c0_79, %c0_80, %c0_81, %c0_82] : memref<1x1x16x4xbf16, #tpu.memory_space<vmem>>, vector<1x1x16x4xbf16>
      %66 = vector.shape_cast %65 : vector<1x1x16x4xbf16> to vector<16x4xbf16>
      %c9 = arith.constant 9 : index
      %c1_83 = arith.constant 1 : index
      %c0_84 = arith.constant 0 : index
      %67 = vector.load %arg9[%c9, %c1_83, %c0_84] : memref<10x18x4xbf16, #tpu.memory_space<vmem>>, vector<1x16x4xbf16>
      %68 = vector.shape_cast %67 : vector<1x16x4xbf16> to vector<16x4xbf16>
      %69 = vector.shape_cast %66 : vector<16x4xbf16> to vector<1x16x4xbf16>
      tpu.vector_store %arg9[%c9, %c1_83, %c0_84], %69 {strides = array<i32>} : memref<10x18x4xbf16, #tpu.memory_space<vmem>>, vector<1x16x4xbf16>,
    } else {
    }
    %true_15 = arith.constant true
    %20 = arith.xori %17, %true_15 : i1
    %21 = arith.extui %20 : i1 to i32
    %c0_i32_16 = arith.constant 0 : i32
    %22 = arith.cmpi ne, %21, %c0_i32_16 : i32
    scf.if %22 {
      %cst_79 = arith.constant 0.000000e+00 : bf16
      %65 = vector.broadcast %cst_79 : bf16 to vector<16x4xbf16>
      %c9 = arith.constant 9 : index
      %c1_80 = arith.constant 1 : index
      %c0_81 = arith.constant 0 : index
      %66 = vector.load %arg9[%c9, %c1_80, %c0_81] : memref<10x18x4xbf16, #tpu.memory_space<vmem>>, vector<1x16x4xbf16>
      %67 = vector.shape_cast %66 : vector<1x16x4xbf16> to vector<16x4xbf16>
      %68 = vector.shape_cast %65 : vector<16x4xbf16> to vector<1x16x4xbf16>
      tpu.vector_store %arg9[%c9, %c1_80, %c0_81], %68 {strides = array<i32>} : memref<10x18x4xbf16, #tpu.memory_space<vmem>>, vector<1x16x4xbf16>,
    } else {
    }
    %cst_17 = arith.constant 0.000000e+00 : bf16
    %23 = vector.broadcast %cst_17 : bf16 to vector<8x16x92xbf16>
    %c0_18 = arith.constant 0 : index
    %c0_19 = arith.constant 0 : index
    %c36 = arith.constant 36 : index
    %24 = vector.load %arg10[%c0_18, %c0_19, %c36] : memref<8x16x128xbf16, #tpu.memory_space<vmem>>, vector<8x16x92xbf16>
    tpu.vector_store %arg10[%c0_18, %c0_19, %c36], %23 {strides = array<i32>} : memref<8x16x128xbf16, #tpu.memory_space<vmem>>, vector<8x16x92xbf16>,
    %c0_20 = arith.constant 0 : index
    %c0_21 = arith.constant 0 : index
    %c0_22 = arith.constant 0 : index
    %25 = vector.load %arg9[%c0_20, %c0_21, %c0_22] : memref<10x18x4xbf16, #tpu.memory_space<vmem>>, vector<8x16x4xbf16>
    %c0_23 = arith.constant 0 : index
    %c0_24 = arith.constant 0 : index
    %c0_25 = arith.constant 0 : index
    %26 = vector.load %arg10[%c0_23, %c0_24, %c0_25] : memref<8x16x128xbf16, #tpu.memory_space<vmem>>, vector<8x16x4xbf16>
    tpu.vector_store %arg10[%c0_23, %c0_24, %c0_25], %25 {strides = array<i32>} : memref<8x16x128xbf16, #tpu.memory_space<vmem>>, vector<8x16x4xbf16>,
    %c0_26 = arith.constant 0 : index
    %c1_27 = arith.constant 1 : index
    %c0_28 = arith.constant 0 : index
    %27 = vector.load %arg9[%c0_26, %c1_27, %c0_28] : memref<10x18x4xbf16, #tpu.memory_space<vmem>>, vector<8x16x4xbf16>
    %c0_29 = arith.constant 0 : index
    %c0_30 = arith.constant 0 : index
    %c4 = arith.constant 4 : index
    %28 = vector.load %arg10[%c0_29, %c0_30, %c4] : memref<8x16x128xbf16, #tpu.memory_space<vmem>>, vector<8x16x4xbf16>
    tpu.vector_store %arg10[%c0_29, %c0_30, %c4], %27 {strides = array<i32>} : memref<8x16x128xbf16, #tpu.memory_space<vmem>>, vector<8x16x4xbf16>,
    %c0_31 = arith.constant 0 : index
    %c2 = arith.constant 2 : index
    %c0_32 = arith.constant 0 : index
    %29 = vector.load %arg9[%c0_31, %c2, %c0_32] : memref<10x18x4xbf16, #tpu.memory_space<vmem>>, vector<8x16x4xbf16>
    %c0_33 = arith.constant 0 : index
    %c0_34 = arith.constant 0 : index
    %c8 = arith.constant 8 : index
    %30 = vector.load %arg10[%c0_33, %c0_34, %c8] : memref<8x16x128xbf16, #tpu.memory_space<vmem>>, vector<8x16x4xbf16>
    tpu.vector_store %arg10[%c0_33, %c0_34, %c8], %29 {strides = array<i32>} : memref<8x16x128xbf16, #tpu.memory_space<vmem>>, vector<8x16x4xbf16>,
    %c1_35 = arith.constant 1 : index
    %c0_36 = arith.constant 0 : index
    %c0_37 = arith.constant 0 : index
    %31 = vector.load %arg9[%c1_35, %c0_36, %c0_37] : memref<10x18x4xbf16, #tpu.memory_space<vmem>>, vector<8x16x4xbf16>
    %c0_38 = arith.constant 0 : index
    %c0_39 = arith.constant 0 : index
    %c12 = arith.constant 12 : index
    %32 = vector.load %arg10[%c0_38, %c0_39, %c12] : memref<8x16x128xbf16, #tpu.memory_space<vmem>>, vector<8x16x4xbf16>
    tpu.vector_store %arg10[%c0_38, %c0_39, %c12], %31 {strides = array<i32>} : memref<8x16x128xbf16, #tpu.memory_space<vmem>>, vector<8x16x4xbf16>,
    %c1_40 = arith.constant 1 : index
    %c1_41 = arith.constant 1 : index
    %c0_42 = arith.constant 0 : index
    %33 = vector.load %arg9[%c1_40, %c1_41, %c0_42] : memref<10x18x4xbf16, #tpu.memory_space<vmem>>, vector<8x16x4xbf16>
    %c0_43 = arith.constant 0 : index
    %c0_44 = arith.constant 0 : index
    %c16 = arith.constant 16 : index
    %34 = vector.load %arg10[%c0_43, %c0_44, %c16] : memref<8x16x128xbf16, #tpu.memory_space<vmem>>, vector<8x16x4xbf16>
    tpu.vector_store %arg10[%c0_43, %c0_44, %c16], %33 {strides = array<i32>} : memref<8x16x128xbf16, #tpu.memory_space<vmem>>, vector<8x16x4xbf16>,
    %c1_45 = arith.constant 1 : index
    %c2_46 = arith.constant 2 : index
    %c0_47 = arith.constant 0 : index
    %35 = vector.load %arg9[%c1_45, %c2_46, %c0_47] : memref<10x18x4xbf16, #tpu.memory_space<vmem>>, vector<8x16x4xbf16>
    %c0_48 = arith.constant 0 : index
    %c0_49 = arith.constant 0 : index
    %c20 = arith.constant 20 : index
    %36 = vector.load %arg10[%c0_48, %c0_49, %c20] : memref<8x16x128xbf16, #tpu.memory_space<vmem>>, vector<8x16x4xbf16>
    tpu.vector_store %arg10[%c0_48, %c0_49, %c20], %35 {strides = array<i32>} : memref<8x16x128xbf16, #tpu.memory_space<vmem>>, vector<8x16x4xbf16>,
    %c2_50 = arith.constant 2 : index
    %c0_51 = arith.constant 0 : index
    %c0_52 = arith.constant 0 : index
    %37 = vector.load %arg9[%c2_50, %c0_51, %c0_52] : memref<10x18x4xbf16, #tpu.memory_space<vmem>>, vector<8x16x4xbf16>
    %c0_53 = arith.constant 0 : index
    %c0_54 = arith.constant 0 : index
    %c24 = arith.constant 24 : index
    %38 = vector.load %arg10[%c0_53, %c0_54, %c24] : memref<8x16x128xbf16, #tpu.memory_space<vmem>>, vector<8x16x4xbf16>
    tpu.vector_store %arg10[%c0_53, %c0_54, %c24], %37 {strides = array<i32>} : memref<8x16x128xbf16, #tpu.memory_space<vmem>>, vector<8x16x4xbf16>,
    %c2_55 = arith.constant 2 : index
    %c1_56 = arith.constant 1 : index
    %c0_57 = arith.constant 0 : index
    %39 = vector.load %arg9[%c2_55, %c1_56, %c0_57] : memref<10x18x4xbf16, #tpu.memory_space<vmem>>, vector<8x16x4xbf16>
    %c0_58 = arith.constant 0 : index
    %c0_59 = arith.constant 0 : index
    %c28 = arith.constant 28 : index
    %40 = vector.load %arg10[%c0_58, %c0_59, %c28] : memref<8x16x128xbf16, #tpu.memory_space<vmem>>, vector<8x16x4xbf16>
    tpu.vector_store %arg10[%c0_58, %c0_59, %c28], %39 {strides = array<i32>} : memref<8x16x128xbf16, #tpu.memory_space<vmem>>, vector<8x16x4xbf16>,
    %c2_60 = arith.constant 2 : index
    %c2_61 = arith.constant 2 : index
    %c0_62 = arith.constant 0 : index
    %41 = vector.load %arg9[%c2_60, %c2_61, %c0_62] : memref<10x18x4xbf16, #tpu.memory_space<vmem>>, vector<8x16x4xbf16>
    %c0_63 = arith.constant 0 : index
    %c0_64 = arith.constant 0 : index
    %c32 = arith.constant 32 : index
    %42 = vector.load %arg10[%c0_63, %c0_64, %c32] : memref<8x16x128xbf16, #tpu.memory_space<vmem>>, vector<8x16x4xbf16>
    tpu.vector_store %arg10[%c0_63, %c0_64, %c32], %41 {strides = array<i32>} : memref<8x16x128xbf16, #tpu.memory_space<vmem>>, vector<8x16x4xbf16>,
    %c0_65 = arith.constant 0 : index
    %c0_66 = arith.constant 0 : index
    %c0_67 = arith.constant 0 : index
    %43 = vector.load %arg10[%c0_65, %c0_66, %c0_67] : memref<8x16x128xbf16, #tpu.memory_space<vmem>>, vector<8x16x128xbf16>
    %44 = arith.index_cast %arg2 : i32 to index
    %c0_68 = arith.constant 0 : index
    %c0_69 = arith.constant 0 : index
    %45 = vector.load %arg6[%44, %c0_68, %c0_69] : memref<1x128x128xbf16, #tpu.memory_space<vmem>>, vector<1x128x128xbf16>
    %46 = vector.shape_cast %45 : vector<1x128x128xbf16> to vector<128x128xbf16>
    %cst_70 = arith.constant dense<0.000000e+00> : vector<8x16x128xf32>
    %47 = tpu.matmul %43, %46, %cst_70 {dimension_numbers = #tpu.dot_dimension_numbers<[2], [0], [0, 1], [1], [0, 0, 0, 1, 1, 1], [], []>} : vector<8x16x128xbf16>, vector<128x128xbf16>, vector<8x16x128xf32> -> vector<8x16x128xf32>
    %48 = arith.index_cast %arg2 : i32 to index
    %c0_71 = arith.constant 0 : index
    %c0_72 = arith.constant 0 : index
    %49 = vector.load %arg7[%48, %c0_71, %c0_72] : memref<1x1x128xf32, #tpu.memory_space<vmem>>, vector<1x1x128xf32>
    %50 = vector.shape_cast %49 : vector<1x1x128xf32> to vector<1x128xf32>
    %51 = vector.shape_cast %50 : vector<1x128xf32> to vector<1x1x128xf32>
    %52 = vector.broadcast %51 : vector<1x1x128xf32> to vector<8x16x128xf32>
    %53 = arith.addf %47, %52 : vector<8x16x128xf32>
    %cst_73 = arith.constant 0.000000e+00 : f32
    %54 = vector.broadcast %cst_73 : f32 to vector<8x16x128xf32>
    %55 = arith.subf %54, %53 : vector<8x16x128xf32>
    %56 = math.exp %55 : vector<8x16x128xf32>
    %cst_74 = arith.constant 1.000000e+00 : f32
    %57 = vector.broadcast %cst_74 : f32 to vector<8x16x128xf32>
    %58 = arith.addf %57, %56 : vector<8x16x128xf32>
    %59 = tpu.reciprocal %58 {approx = true} : vector<8x16x128xf32> -> vector<8x16x128xf32>
    %60 = arith.mulf %53, %59 : vector<8x16x128xf32>
    %61 = arith.truncf %60 : vector<8x16x128xf32> to vector<8x16x128xbf16>
    %c0_75 = arith.constant 0 : index
    %c0_76 = arith.constant 0 : index
    %c0_77 = arith.constant 0 : index
    %c0_78 = arith.constant 0 : index
    %62 = vector.load %arg8[%c0_75, %c0_76, %c0_77, %c0_78] : memref<1x8x16x128xbf16, #tpu.memory_space<vmem>>, vector<1x8x16x128xbf16>
    %63 = vector.shape_cast %62 : vector<1x8x16x128xbf16> to vector<8x16x128xbf16>
    %64 = vector.shape_cast %61 : vector<8x16x128xbf16> to vector<1x8x16x128xbf16>
    tpu.vector_store %arg8[%c0_75, %c0_76, %c0_77, %c0_78], %64 {strides = array<i32>} : memref<1x8x16x128xbf16, #tpu.memory_space<vmem>>, vector<1x8x16x128xbf16>,
    return
  }
  func.func @transform_0(%arg0: i32, %arg1: i32, %arg2: i32) -> (i32, i32, i32, i32) {
    %c0_i32 = arith.constant 0 : i32
    %c0_i32_0 = arith.constant 0 : i32
    %c0_i32_1 = arith.constant 0 : i32
    return %arg0, %arg1, %c0_i32, %c0_i32_0 : i32, i32, i32, i32
  }
  func.func @transform_1(%arg0: i32, %arg1: i32, %arg2: i32) -> (i32, i32, i32, i32) {
    %c8_i32 = arith.constant 8 : i32
    %0 = arith.muli %arg1, %c8_i32 : i32
    %c1_i32 = arith.constant 1 : i32
    %1 = arith.subi %0, %c1_i32 : i32
    %c0_i32 = arith.constant 0 : i32
    %2 = arith.maxsi %1, %c0_i32 : i32
    %c0_i32_0 = arith.constant 0 : i32
    %c0_i32_1 = arith.constant 0 : i32
    %c0_i32_2 = arith.constant 0 : i32
    return %arg0, %2, %c0_i32_0, %c0_i32_1 : i32, i32, i32, i32
  }
  func.func @transform_2(%arg0: i32, %arg1: i32, %arg2: i32) -> (i32, i32, i32, i32) {
    %c1_i32 = arith.constant 1 : i32
    %0 = arith.addi %arg1, %c1_i32 : i32
    %c8_i32 = arith.constant 8 : i32
    %1 = arith.muli %0, %c8_i32 : i32
    %c0_i32 = arith.constant 0 : i32
    %2 = arith.addi %1, %c0_i32 : i32
    %c15_i32 = arith.constant 15 : i32
    %3 = arith.minsi %2, %c15_i32 : i32
    %c0_i32_0 = arith.constant 0 : i32
    %c0_i32_1 = arith.constant 0 : i32
    %c0_i32_2 = arith.constant 0 : i32
    return %arg0, %3, %c0_i32_0, %c0_i32_1 : i32, i32, i32, i32
  }
  func.func @transform_3(%arg0: i32, %arg1: i32, %arg2: i32) -> (i32, i32, i32) {
    %c0_i32 = arith.constant 0 : i32
    %c0_i32_0 = arith.constant 0 : i32
    %c0_i32_1 = arith.constant 0 : i32
    %c0_i32_2 = arith.constant 0 : i32
    return %c0_i32, %c0_i32_0, %c0_i32_1 : i32, i32, i32
  }
  func.func @transform_4(%arg0: i32, %arg1: i32, %arg2: i32) -> (i32, i32, i32) {
    %c0_i32 = arith.constant 0 : i32
    %c0_i32_0 = arith.constant 0 : i32
    %c0_i32_1 = arith.constant 0 : i32
    %c0_i32_2 = arith.constant 0 : i32
    return %c0_i32, %c0_i32_0, %c0_i32_1 : i32, i32, i32
  }
  func.func @transform_5(%arg0: i32, %arg1: i32, %arg2: i32) -> (i32, i32, i32, i32) {
    %c0_i32 = arith.constant 0 : i32
    %c0_i32_0 = arith.constant 0 : i32
    return %arg0, %arg1, %c0_i32, %arg2 : i32, i32, i32, i32
  }
}

</mosaic_0001>

<llo_original>
// kernel: tpu_custom_call.1
$region0: #{tpu_custom_call.1}
  #allocation0 [shape = 'u32[]', space=smem, size = 0x4, offset = 0x4, fixed_abs, tag = 'smem constant byte address 0x4 - core index']
  #allocation1 [shape = 'u32[144,128]{1,0:T(1,128)}', space=vmem, size = 0x12000, scoped, tag = 'internal scratch']
  #allocation2 [shape = 'bf16[10,18,4]{2,1,0:T(8,128)(2,1)}', space=vmem, size = 0xf000, scoped, tag = 'scratch operand']
  #allocation3 [shape = 'bf16[8,16,128]{2,1,0:T(16,128)(2,1)}', space=vmem, size = 0x8000, scoped, tag = 'scratch operand']
  %s0 = inlined_call_operand.vmem [shape: bf16[2,16,16,4], index: 0, kind: input, shape index: {}]
  %s1 = inlined_call_operand.vmem [shape: bf16[2,16,16,4], index: 1, kind: input, shape index: {}]
  %s2 = inlined_call_operand.vmem [shape: bf16[2,16,16,4], index: 2, kind: input, shape index: {}]
  %s3 = inlined_call_operand.vmem [shape: bf16[1,128,128], index: 3, kind: input, shape index: {}]
  %s4 = inlined_call_operand.vmem [shape: f32[1,1,128], index: 4, kind: input, shape index: {}]
  %s5 = inlined_call_operand.hbm [shape: bf16[2,16,16,128], index: 5, kind: output, shape index: {}]
  %s6 = sld [smem:[#allocation0]]
  $region69: #{tpu_custom_call.1} parent=0
    _
  %s8 = ssub.s32 1, %s6
  %s9 = scalar_select 0, %s8, %s6
  $region1: #{tpu_custom_call.1} parent=0
    #allocation4 [shape = 'u8[65536]{0}', space=vmem, size = 0x10000, scoped, tag = 'output window, operand 0']
    #allocation5 [shape = 's32[2]{0}', space=sflag, size = 0x8, scoped, tag = 'scoped memory for tpu_custom_call.1']
    %10 = vsyncpa [#allocation5], 0
    %s11 = scalar_lea.sflag [#allocation5], 1
    %12 = vsyncpa %s11, 0
    loop: start=0, step=1, limit=6
    $region2: #{tpu_custom_call.1} parent=1 // loop_pre_header
      _
    $region3: #{tpu_custom_call.1} parent=1 // loop_header
      %s14 = sphi 0, %s18
      %p15 = scmp.ge.s32.totalorder %s14, 6
      %s21 = sphi 0, %s40
      %s22 = sphi 0, %s36
      %s23 = sphi 0, %s32
      %s24 = sphi 0, %s21
      %s25 = sphi 0, %s22
      %s26 = sphi 0, %s23
      %s27 = sphi 0, %s24
      %s28 = sphi 0, %s25
      %s29 = sphi 0, %s26
      %s45 = sphi 0, %s47
      %s48 = sphi 0, %s45
      %s49 = sphi 0, %s48
      %s65 = sphi 0, %s49
      %s81 = sphi 0, %s83
      %s84 = sphi 0, %s81
      %s85 = sphi 0, %s84
      %s101 = sphi 0, %s85
      %s117 = sphi 0, %s119
      %s120 = sphi 0, %s117
      %s121 = sphi 0, %s120
      %s137 = sphi 0, %s121
      %s141 = sphi 0, %s141
      %s143 = sphi 0, %s141
      %s144 = sphi 0, %s143
      %s158 = sphi 0, %s144
      %s162 = sphi 0, %s162
      %s164 = sphi 0, %s162
      %s165 = sphi 0, %s164
      %s179 = sphi 0, %s165
      %s189 = sphi 0, %s191
      %s192 = sphi 0, %s189
      %s193 = sphi 0, %s192
      %s209 = sphi 0, %s193
    $region4: #{tpu_custom_call.1} parent=1 // loop_header_branch
      %17 = sbr.rel (%p15) target = $region8
    $region5: #{tpu_custom_call.1} parent=1 // loop_body
      %s19 = ssub.s32 %s14, 1
      %s20 = ssub.s32 %s14, 2
      %s30 = sadd.s32 1, %s23
      %p31 = scmp.ge.s32.totalorder %s30, 1
      %s32 = scalar_select %p31, 0, %s30
      %s33 = sadd.s32 1, %s22
      %s34 = scalar_select %p31, %s33, %s22
      %p35 = scmp.ge.s32.totalorder %s34, 2
      %s36 = scalar_select %p35, 0, %s34
      %s37 = sadd.s32 1, %s21
      %s38 = scalar_select %p35, %s37, %s21
      %p39 = scmp.ge.s32.totalorder %s38, 2
      %s40 = scalar_select %p39, 0, %s38
      %s41 = ssub.s32 %s21, %s40
      %s42 = ssub.s32 %s22, %s36
      %s43 = sor.u32 %s41, %s42
      %p44 = scmp.eq.s32.totalorder %s43, 0
      %s46 = sadd.s32 %s45, 1
      %s47 = scalar_select %p44, %s45, %s46
      %p50 = pneg %p44
      %p51 = scmp.eq.s32.totalorder %s14, 3
      %p52 = por %p50, %p51
      %p53 = scmp.ne.s32.totalorder %s45, %s48
      %p54 = scmp.eq.s32.totalorder %s14, 0
      %p55 = por %p53, %p54
      %p56 = scmp.ne.s32.totalorder %s45, %s48
      %p57 = scmp.eq.s32.totalorder %s19, 3
      %p58 = por %p56, %p57
      %p59 = scmp.ne.s32.totalorder %s48, %s49
      %p60 = scmp.eq.s32.totalorder %s19, 0
      %p61 = por %p59, %p60
      %p62 = scmp.ne.s32.totalorder %s48, %s49
      %p63 = scmp.eq.s32.totalorder %s20, 3
      %p64 = por %p62, %p63
      %p66 = scmp.ne.s32.totalorder %s49, %s65
      %p67 = scmp.eq.s32.totalorder %s20, 0
      %p68 = por %p66, %p67
      %s69 = smul.u32 %s22, 8
      %s70 = ssub.s32 %s69, 1
      %p71 = scmp.gt.s32.totalorder %s70, 0
      %s72 = scalar_select %p71, %s70, 0
      %s73 = smul.u32 %s36, 8
      %s74 = ssub.s32 %s73, 1
      %p75 = scmp.gt.s32.totalorder %s74, 0
      %s76 = scalar_select %p75, %s74, 0
      %s77 = ssub.s32 %s21, %s40
      %s78 = ssub.s32 %s72, %s76
      %s79 = sor.u32 %s77, %s78
      %p80 = scmp.eq.s32.totalorder %s79, 0
      %s82 = sadd.s32 %s81, 1
      %s83 = scalar_select %p80, %s81, %s82
      %p86 = pneg %p80
      %p87 = scmp.eq.s32.totalorder %s14, 3
      %p88 = por %p86, %p87
      %p89 = scmp.ne.s32.totalorder %s81, %s84
      %p90 = scmp.eq.s32.totalorder %s14, 0
      %p91 = por %p89, %p90
      %p92 = scmp.ne.s32.totalorder %s81, %s84
      %p93 = scmp.eq.s32.totalorder %s19, 3
      %p94 = por %p92, %p93
      %p95 = scmp.ne.s32.totalorder %s84, %s85
      %p96 = scmp.eq.s32.totalorder %s19, 0
      %p97 = por %p95, %p96
      %p98 = scmp.ne.s32.totalorder %s84, %s85
      %p99 = scmp.eq.s32.totalorder %s20, 3
      %p100 = por %p98, %p99
      %p102 = scmp.ne.s32.totalorder %s85, %s101
      %p103 = scmp.eq.s32.totalorder %s20, 0
      %p104 = por %p102, %p103
      %s105 = sadd.s32 %s22, 1
      %s106 = smul.u32 %s105, 8
      %p107 = scmp.lt.s32.totalorder %s106, 15
      %s108 = scalar_select %p107, %s106, 15
      %s109 = sadd.s32 %s36, 1
      %s110 = smul.u32 %s109, 8
      %p111 = scmp.lt.s32.totalorder %s110, 15
      %s112 = scalar_select %p111, %s110, 15
      %s113 = ssub.s32 %s21, %s40
      %s114 = ssub.s32 %s108, %s112
      %s115 = sor.u32 %s113, %s114
      %p116 = scmp.eq.s32.totalorder %s115, 0
      %s118 = sadd.s32 %s117, 1
      %s119 = scalar_select %p116, %s117, %s118
      %p122 = pneg %p116
      %p123 = scmp.eq.s32.totalorder %s14, 3
      %p124 = por %p122, %p123
      %p125 = scmp.ne.s32.totalorder %s117, %s120
      %p126 = scmp.eq.s32.totalorder %s14, 0
      %p127 = por %p125, %p126
      %p128 = scmp.ne.s32.totalorder %s117, %s120
      %p129 = scmp.eq.s32.totalorder %s19, 3
      %p130 = por %p128, %p129
      %p131 = scmp.ne.s32.totalorder %s120, %s121
      %p132 = scmp.eq.s32.totalorder %s19, 0
      %p133 = por %p131, %p132
      %p134 = scmp.ne.s32.totalorder %s120, %s121
      %p135 = scmp.eq.s32.totalorder %s20, 3
      %p136 = por %p134, %p135
      %p138 = scmp.ne.s32.totalorder %s121, %s137
      %p139 = scmp.eq.s32.totalorder %s20, 0
      %p140 = por %p138, %p139
      %s142 = sadd.s32 %s141, 1
      %p145 = scmp.eq.s32.totalorder %s14, 3
      %p146 = scmp.ne.s32.totalorder %s141, %s143
      %p147 = scmp.eq.s32.totalorder %s14, 0
      %p148 = por %p146, %p147
      %p149 = scmp.ne.s32.totalorder %s141, %s143
      %p150 = scmp.eq.s32.totalorder %s19, 3
      %p151 = por %p149, %p150
      %p152 = scmp.ne.s32.totalorder %s143, %s144
      %p153 = scmp.eq.s32.totalorder %s19, 0
      %p154 = por %p152, %p153
      %p155 = scmp.ne.s32.totalorder %s143, %s144
      %p156 = scmp.eq.s32.totalorder %s20, 3
      %p157 = por %p155, %p156
      %p159 = scmp.ne.s32.totalorder %s144, %s158
      %p160 = scmp.eq.s32.totalorder %s20, 0
      %p161 = por %p159, %p160
      %s163 = sadd.s32 %s162, 1
      %p166 = scmp.eq.s32.totalorder %s14, 3
      %p167 = scmp.ne.s32.totalorder %s162, %s164
      %p168 = scmp.eq.s32.totalorder %s14, 0
      %p169 = por %p167, %p168
      %p170 = scmp.ne.s32.totalorder %s162, %s164
      %p171 = scmp.eq.s32.totalorder %s19, 3
      %p172 = por %p170, %p171
      %p173 = scmp.ne.s32.totalorder %s164, %s165
      %p174 = scmp.eq.s32.totalorder %s19, 0
      %p175 = por %p173, %p174
      %p176 = scmp.ne.s32.totalorder %s164, %s165
      %p177 = scmp.eq.s32.totalorder %s20, 3
      %p178 = por %p176, %p177
      %p180 = scmp.ne.s32.totalorder %s165, %s179
      %p181 = scmp.eq.s32.totalorder %s20, 0
      %p182 = por %p180, %p181
      %s183 = ssub.s32 %s21, %s40
      %s184 = ssub.s32 %s22, %s36
      %s185 = sor.u32 %s183, %s184
      %s186 = ssub.s32 %s23, %s32
      %s187 = sor.u32 %s185, %s186
      %p188 = scmp.eq.s32.totalorder %s187, 0
      %s190 = sadd.s32 %s189, 1
      %s191 = scalar_select %p188, %s189, %s190
      %p194 = pneg %p188
      %p195 = scmp.eq.s32.totalorder %s14, 3
      %p196 = por %p194, %p195
      %p197 = scmp.ne.s32.totalorder %s189, %s192
      %p198 = scmp.eq.s32.totalorder %s14, 0
      %p199 = por %p197, %p198
      %p200 = scmp.ne.s32.totalorder %s189, %s192
      %p201 = scmp.eq.s32.totalorder %s19, 3
      %p202 = por %p200, %p201
      %p203 = scmp.ne.s32.totalorder %s192, %s193
      %p204 = scmp.eq.s32.totalorder %s19, 0
      %p205 = por %p203, %p204
      %p206 = scmp.ne.s32.totalorder %s192, %s193
      %p207 = scmp.eq.s32.totalorder %s20, 3
      %p208 = por %p206, %p207
      %p210 = scmp.ne.s32.totalorder %s193, %s209
      %p211 = scmp.eq.s32.totalorder %s20, 0
      %p212 = por %p210, %p211
      %p213 = scmp.le.s32.totalorder 1, %s14
      %p214 = scmp.lt.s32.totalorder %s14, 5
      %p215 = pnand %p213, %p214
      %p216 = pneg %p215
      // Predicated region
      $region9: #{tpu_custom_call.1} parent=5 // pred_check
        _
      $region10: #{tpu_custom_call.1} parent=5 // pred_check_branch
        %218 = sbr.rel (%p215) target = $region12
      $region11: #{tpu_custom_call.1} parent=5 // pred_region
        %s219 = ssub.s32 %s14, 1
        // Predicated region
        $region13: #{tpu_custom_call.1} parent=11 // pred_check
          %p220 = pneg %p154
        $region14: #{tpu_custom_call.1} parent=11 // pred_check_branch
          %222 = sbr.rel (%p220) target = $region16
        $region15: #{tpu_custom_call.1} parent=11 // pred_region
          _
        $region16: #{tpu_custom_call.1} parent=11 // pred_fallthru
          _
        // Predicated region
        $region17: #{tpu_custom_call.1} parent=11 // pred_check
          %p223 = pneg %p175
        $region18: #{tpu_custom_call.1} parent=11 // pred_check_branch
          %225 = sbr.rel (%p223) target = $region20
        $region19: #{tpu_custom_call.1} parent=11 // pred_region
          _
        $region20: #{tpu_custom_call.1} parent=11 // pred_fallthru
          _
      $region12: #{tpu_custom_call.1} parent=5 // pred_fallthru
        _
      %p226 = scmp.lt.s32.totalorder %s14, 4
      // Predicated region
      $region21: #{tpu_custom_call.1} parent=5 // pred_check
        %p227 = pneg %p226
      $region22: #{tpu_custom_call.1} parent=5 // pred_check_branch
        %229 = sbr.rel (%p227) target = $region24
      $region23: #{tpu_custom_call.1} parent=5 // pred_region
        // Predicated region
        $region25: #{tpu_custom_call.1} parent=23 // pred_check
          %p230 = pneg %p55
        $region26: #{tpu_custom_call.1} parent=23 // pred_check_branch
          %232 = sbr.rel (%p230) target = $region28
        $region27: #{tpu_custom_call.1} parent=23 // pred_region
          %s233 = smul.u32 8, %s22
          %p234 = scmp.lt.s32.totalorder %s21, 1
          %s235 = scalar_select %p234, %s21, 1
          %p236 = scmp.lt.s32.totalorder %s233, 15
          %s237 = scalar_select %p236, %s233, 15
          %s238 = smul.addr %s237, 2
          %s239 = smul.addr %s235, 32
          %s240 = sadd.s32 %s238, %s239
          %s241 = smul.addr %s240, 4
          %s242 = scalar_lea.vmem %s0, %s241
          %s243 = smul.u32 8, %s22
        $region28: #{tpu_custom_call.1} parent=23 // pred_fallthru
          _
        // Predicated region
        $region29: #{tpu_custom_call.1} parent=23 // pred_check
          %p244 = pneg %p91
        $region30: #{tpu_custom_call.1} parent=23 // pred_check_branch
          %246 = sbr.rel (%p244) target = $region32
        $region31: #{tpu_custom_call.1} parent=23 // pred_region
          %s247 = smul.u32 %s22, 8
          %s248 = ssub.s32 %s247, 1
          %p249 = scmp.gt.s32.totalorder %s248, 0
          %s250 = scalar_select %p249, %s248, 0
          %p251 = scmp.lt.s32.totalorder %s21, 1
          %s252 = scalar_select %p251, %s21, 1
          %p253 = scmp.lt.s32.totalorder %s250, 15
          %s254 = scalar_select %p253, %s250, 15
          %s255 = smul.addr %s254, 2
          %s256 = smul.addr %s252, 32
          %s257 = sadd.s32 %s255, %s256
          %s258 = smul.addr %s257, 4
          %s259 = scalar_lea.vmem %s1, %s258
          %s260 = smul.u32 %s22, 8
          %s261 = ssub.s32 %s260, 1
          %p262 = scmp.gt.s32.totalorder %s261, 0
          %s263 = scalar_select %p262, %s261, 0
        $region32: #{tpu_custom_call.1} parent=23 // pred_fallthru
          _
        // Predicated region
        $region33: #{tpu_custom_call.1} parent=23 // pred_check
          %p264 = pneg %p127
        $region34: #{tpu_custom_call.1} parent=23 // pred_check_branch
          %266 = sbr.rel (%p264) target = $region36
        $region35: #{tpu_custom_call.1} parent=23 // pred_region
          %s267 = sadd.s32 %s22, 1
          %s268 = smul.u32 %s267, 8
          %p269 = scmp.lt.s32.totalorder %s268, 15
          %s270 = scalar_select %p269, %s268, 15
          %p271 = scmp.lt.s32.totalorder %s21, 1
          %s272 = scalar_select %p271, %s21, 1
          %p273 = scmp.lt.s32.totalorder %s270, 15
          %s274 = scalar_select %p273, %s270, 15
          %s275 = smul.addr %s274, 2
          %s276 = smul.addr %s272, 32
          %s277 = sadd.s32 %s275, %s276
          %s278 = smul.addr %s277, 4
          %s279 = scalar_lea.vmem %s2, %s278
          %s280 = sadd.s32 %s22, 1
          %s281 = smul.u32 %s280, 8
          %p282 = scmp.lt.s32.totalorder %s281, 15
          %s283 = scalar_select %p282, %s281, 15
        $region36: #{tpu_custom_call.1} parent=23 // pred_fallthru
          _
      $region24: #{tpu_custom_call.1} parent=5 // pred_fallthru
        _
      %p284 = scmp.le.s32.totalorder 1, %s14
      %p285 = scmp.lt.s32.totalorder %s14, 5
      %p286 = pnand %p284, %p285
      %p287 = pneg %p286
      // Predicated region
      $region37: #{tpu_custom_call.1} parent=5 // pred_check
        _
      $region38: #{tpu_custom_call.1} parent=5 // pred_check_branch
        %289 = sbr.rel (%p286) target = $region40
      $region39: #{tpu_custom_call.1} parent=5 // pred_region
        %s290 = ssub.s32 %s14, 1
        %s291 = smul.u32 8, %s25
        %p292 = scmp.lt.s32.totalorder %s24, 1
        %s293 = scalar_select %p292, %s24, 1
        %p294 = scmp.lt.s32.totalorder %s291, 15
        %s295 = scalar_select %p294, %s291, 15
        %s296 = smul.addr %s295, 2
        %s297 = smul.addr %s293, 32
        %s298 = sadd.s32 %s296, %s297
        %s299 = smul.addr %s298, 4
        %s300 = scalar_lea.vmem %s0, %s299
        %p301 = pneg %p61
        %p302 = pneg %p58
        %s303 = smul.u32 %s25, 8
        %s304 = ssub.s32 %s303, 1
        %p305 = scmp.gt.s32.totalorder %s304, 0
        %s306 = scalar_select %p305, %s304, 0
        %p307 = scmp.lt.s32.totalorder %s24, 1
        %s308 = scalar_select %p307, %s24, 1
        %p309 = scmp.lt.s32.totalorder %s306, 15
        %s310 = scalar_select %p309, %s306, 15
        %s311 = smul.addr %s310, 2
        %s312 = smul.addr %s308, 32
        %s313 = sadd.s32 %s311, %s312
        %s314 = smul.addr %s313, 4
        %s315 = scalar_lea.vmem %s1, %s314
        %p316 = pneg %p97
        %p317 = pneg %p94
        %s318 = sadd.s32 %s25, 1
        %s319 = smul.u32 %s318, 8
        %p320 = scmp.lt.s32.totalorder %s319, 15
        %s321 = scalar_select %p320, %s319, 15
        %p322 = scmp.lt.s32.totalorder %s24, 1
        %s323 = scalar_select %p322, %s24, 1
        %p324 = scmp.lt.s32.totalorder %s321, 15
        %s325 = scalar_select %p324, %s321, 15
        %s326 = smul.addr %s325, 2
        %s327 = smul.addr %s323, 32
        %s328 = sadd.s32 %s326, %s327
        %s329 = smul.addr %s328, 4
        %s330 = scalar_lea.vmem %s2, %s329
        %p331 = pneg %p133
        %p332 = pneg %p130
        %p333 = pneg %p154
        %p334 = pneg %p151
        %p335 = pneg %p175
        %p336 = pneg %p172
        %p337 = pneg %p205
        %p338 = pneg %p202
        %s339 = sand.u32 %s192, 1
        %s340 = scalar_lea.sflag [#allocation5], %s339
        %s341 = sand.u32 %s192, 1
        %s342 = smul.addr %s341, 64
        %s343 = scalar_lea.vmem [#allocation4], %s342
        %s344 = smul.u32 8, %s25
        %p345 = scmp.lt.s32.totalorder %s24, 1
        %s346 = scalar_select %p345, %s24, 1
        %p347 = scmp.lt.s32.totalorder %s344, 15
        %s348 = scalar_select %p347, %s344, 15
        %s349 = smul.addr %s348, 2
        %s350 = smul.addr %s346, 32
        %s351 = sadd.s32 %s349, %s350
        %s352 = smul.addr %s351, 4
        %s353 = scalar_lea.vmem %s0, %s352
        %s354 = smul.u32 8, %s25
        %s355 = smul.u32 %s25, 8
        %s356 = ssub.s32 %s355, 1
        %p357 = scmp.gt.s32.totalorder %s356, 0
        %s358 = scalar_select %p357, %s356, 0
        %p359 = scmp.lt.s32.totalorder %s24, 1
        %s360 = scalar_select %p359, %s24, 1
        %p361 = scmp.lt.s32.totalorder %s358, 15
        %s362 = scalar_select %p361, %s358, 15
        %s363 = smul.addr %s362, 2
        %s364 = smul.addr %s360, 32
        %s365 = sadd.s32 %s363, %s364
        %s366 = smul.addr %s365, 4
        %s367 = scalar_lea.vmem %s1, %s366
        %s368 = smul.u32 %s25, 8
        %s369 = ssub.s32 %s368, 1
        %p370 = scmp.gt.s32.totalorder %s369, 0
        %s371 = scalar_select %p370, %s369, 0
        %s372 = sadd.s32 %s25, 1
        %s373 = smul.u32 %s372, 8
        %p374 = scmp.lt.s32.totalorder %s373, 15
        %s375 = scalar_select %p374, %s373, 15
        %p376 = scmp.lt.s32.totalorder %s24, 1
        %s377 = scalar_select %p376, %s24, 1
        %p378 = scmp.lt.s32.totalorder %s375, 15
        %s379 = scalar_select %p378, %s375, 15
        %s380 = smul.addr %s379, 2
        %s381 = smul.addr %s377, 32
        %s382 = sadd.s32 %s380, %s381
        %s383 = smul.addr %s382, 4
        %s384 = scalar_lea.vmem %s2, %s383
        %s385 = sadd.s32 %s25, 1
        %s386 = smul.u32 %s385, 8
        %p387 = scmp.lt.s32.totalorder %s386, 15
        %s388 = scalar_select %p387, %s386, 15
        %s389 = smul.u32 8, %s25
        %vm391 = vcmask 24576
        %vm392 = vsmask.f32 256
        %vm393 = vmand %vm391, %vm392
        %v394 = vld [vmem:[#allocation2] sm:$0x1]
        %v395 = vsel %vm393, 0, %v394
        %396 = vst [vmem:[#allocation2] sm:$0x1] %v395
        %v397 = vld [vmem:[#allocation2 + $0xc] sm:$0x1]
        %v398 = vsel %vm393, 0, %v397
        %399 = vst [vmem:[#allocation2 + $0xc] sm:$0x1] %v398
        %v400 = vld [vmem:[#allocation2 + $0x18] sm:$0x1]
        %v401 = vsel %vm393, 0, %v400
        %402 = vst [vmem:[#allocation2 + $0x18] sm:$0x1] %v401
        %v403 = vld [vmem:[#allocation2 + $0x24] sm:$0x1]
        %v404 = vsel %vm393, 0, %v403
        %405 = vst [vmem:[#allocation2 + $0x24] sm:$0x1] %v404
        %v406 = vld [vmem:[#allocation2 + $0x30] sm:$0x1]
        %v407 = vsel %vm393, 0, %v406
        %408 = vst [vmem:[#allocation2 + $0x30] sm:$0x1] %v407
        %v409 = vld [vmem:[#allocation2 + $0x3c] sm:$0x1]
        %v410 = vsel %vm393, 0, %v409
        %411 = vst [vmem:[#allocation2 + $0x3c] sm:$0x1] %v410
        %v412 = vld [vmem:[#allocation2 + $0x48] sm:$0x1]
        %v413 = vsel %vm393, 0, %v412
        %414 = vst [vmem:[#allocation2 + $0x48] sm:$0x1] %v413
        %v415 = vld [vmem:[#allocation2 + $0x54] sm:$0x1]
        %v416 = vsel %vm393, 0, %v415
        %417 = vst [vmem:[#allocation2 + $0x54] sm:$0x1] %v416
        %v418 = vld [vmem:[#allocation2 + $0x60] sm:$0x1]
        %v419 = vsel %vm393, 0, %v418
        %420 = vst [vmem:[#allocation2 + $0x60] sm:$0x1] %v419
        %v421 = vld [vmem:[#allocation2 + $0x6c] sm:$0x1]
        %v422 = vsel %vm393, 0, %v421
        %423 = vst [vmem:[#allocation2 + $0x6c] sm:$0x1] %v422
        %vm424 = vsmask.f32 7938
        %vm425 = vmand %vm391, %vm424
        %v426 = vld [vmem:[#allocation2 + $0x8] sm:$0x1]
        %v427 = vsel %vm425, 0, %v426
        %428 = vst [vmem:[#allocation2 + $0x8] sm:$0x1] %v427
        %v429 = vld [vmem:[#allocation2 + $0x14] sm:$0x1]
        %v430 = vsel %vm425, 0, %v429
        %431 = vst [vmem:[#allocation2 + $0x14] sm:$0x1] %v430
        %v432 = vld [vmem:[#allocation2 + $0x20] sm:$0x1]
        %v433 = vsel %vm425, 0, %v432
        %434 = vst [vmem:[#allocation2 + $0x20] sm:$0x1] %v433
        %v435 = vld [vmem:[#allocation2 + $0x2c] sm:$0x1]
        %v436 = vsel %vm425, 0, %v435
        %437 = vst [vmem:[#allocation2 + $0x2c] sm:$0x1] %v436
        %v438 = vld [vmem:[#allocation2 + $0x38] sm:$0x1]
        %v439 = vsel %vm425, 0, %v438
        %440 = vst [vmem:[#allocation2 + $0x38] sm:$0x1] %v439
        %v441 = vld [vmem:[#allocation2 + $0x44] sm:$0x1]
        %v442 = vsel %vm425, 0, %v441
        %443 = vst [vmem:[#allocation2 + $0x44] sm:$0x1] %v442
        %v444 = vld [vmem:[#allocation2 + $0x50] sm:$0x1]
        %v445 = vsel %vm425, 0, %v444
        %446 = vst [vmem:[#allocation2 + $0x50] sm:$0x1] %v445
        %v447 = vld [vmem:[#allocation2 + $0x5c] sm:$0x1]
        %v448 = vsel %vm425, 0, %v447
        %449 = vst [vmem:[#allocation2 + $0x5c] sm:$0x1] %v448
        %v450 = vld [vmem:[#allocation2 + $0x68] sm:$0x1]
        %v451 = vsel %vm425, 0, %v450
        %452 = vst [vmem:[#allocation2 + $0x68] sm:$0x1] %v451
        %v453 = vld [vmem:[#allocation2 + $0x74] sm:$0x1]
        %v454 = vsel %vm425, 0, %v453
        %455 = vst [vmem:[#allocation2 + $0x74] sm:$0x1] %v454
        %v456 = vld [vmem:[%s353] sm:$0xf]
        %v457 = vld [vmem:[%s353 + $0x4] sm:$0xf]
        %v458 = vld [vmem:[%s353 + $0x8] sm:$0xf]
        %v459 = vld [vmem:[%s353 + $0xc] sm:$0xf]
        %v460 = vld [vmem:[%s353 + $0x10] sm:$0xf]
        %v461 = vld [vmem:[%s353 + $0x14] sm:$0xf]
        %v462 = vld [vmem:[%s353 + $0x18] sm:$0xf]
        %v463 = vld [vmem:[%s353 + $0x1c] sm:$0xf]
        %v464 = vld [vmem:[%s353 + $0x20] sm:$0xf]
        %v465 = vld [vmem:[%s353 + $0x24] sm:$0xf]
        %v466 = vld [vmem:[%s353 + $0x28] sm:$0xf]
        %v467 = vld [vmem:[%s353 + $0x2c] sm:$0xf]
        %v468 = vld [vmem:[%s353 + $0x30] sm:$0xf]
        %v469 = vld [vmem:[%s353 + $0x34] sm:$0xf]
        %v470 = vld [vmem:[%s353 + $0x38] sm:$0xf]
        %v471 = vld [vmem:[%s353 + $0x3c] sm:$0xf]
        %vm472 = vsmask.f32 4368
        %vm473 = vmor %vm392, %vm472
        %v475 = vshrl.u32 %v456, 16
        %v477 = vrot.slane %v475, 7
        %v478 = vshll.u32 %v456, 16
        %v480 = vor.u32 %v477, %v478
        %v481 = vrot.slane %v477, 4
        %v483 = vshrl.u32 %v457, 16
        %v485 = vrot.slane %v483, 7
        %v486 = vshll.u32 %v457, 16
        %v488 = vor.u32 %v485, %v486
        %v489 = vsel %vm473, %v481, %v488
        %v490 = vrot.slane %v485, 4
        %v492 = vshrl.u32 %v458, 16
        %v494 = vrot.slane %v492, 7
        %v495 = vshll.u32 %v458, 16
        %v497 = vor.u32 %v494, %v495
        %v498 = vrot.slane %v494, 4
        %v500 = vshrl.u32 %v459, 16
        %v502 = vrot.slane %v500, 7
        %v503 = vshll.u32 %v459, 16
        %v505 = vor.u32 %v502, %v503
        %v506 = vsel %vm473, %v498, %v505
        %v507 = vrot.slane %v502, 4
        %v509 = vshrl.u32 %v460, 16
        %v511 = vrot.slane %v509, 7
        %v512 = vshll.u32 %v460, 16
        %v514 = vor.u32 %v511, %v512
        %v515 = vrot.slane %v511, 4
        %v517 = vshrl.u32 %v461, 16
        %v519 = vrot.slane %v517, 7
        %v520 = vshll.u32 %v461, 16
        %v522 = vor.u32 %v519, %v520
        %v523 = vsel %vm473, %v515, %v522
        %v524 = vrot.slane %v519, 4
        %v526 = vshrl.u32 %v462, 16
        %v528 = vrot.slane %v526, 7
        %v529 = vshll.u32 %v462, 16
        %v531 = vor.u32 %v528, %v529
        %v532 = vrot.slane %v528, 4
        %v534 = vshrl.u32 %v463, 16
        %v536 = vrot.slane %v534, 7
        %v537 = vshll.u32 %v463, 16
        %v539 = vor.u32 %v536, %v537
        %v540 = vsel %vm473, %v532, %v539
        %v541 = vrot.slane %v536, 4
        %v543 = vshrl.u32 %v464, 16
        %v545 = vrot.slane %v543, 7
        %v546 = vshll.u32 %v464, 16
        %v548 = vor.u32 %v545, %v546
        %v549 = vrot.slane %v545, 4
        %v551 = vshrl.u32 %v465, 16
        %v553 = vrot.slane %v551, 7
        %v554 = vshll.u32 %v465, 16
        %v556 = vor.u32 %v553, %v554
        %v557 = vsel %vm473, %v549, %v556
        %v558 = vrot.slane %v553, 4
        %v560 = vshrl.u32 %v466, 16
        %v562 = vrot.slane %v560, 7
        %v563 = vshll.u32 %v466, 16
        %v565 = vor.u32 %v562, %v563
        %v566 = vrot.slane %v562, 4
        %v568 = vshrl.u32 %v467, 16
        %v570 = vrot.slane %v568, 7
        %v571 = vshll.u32 %v467, 16
        %v573 = vor.u32 %v570, %v571
        %v574 = vsel %vm473, %v566, %v573
        %v575 = vrot.slane %v570, 4
        %v577 = vshrl.u32 %v468, 16
        %v579 = vrot.slane %v577, 7
        %v580 = vshll.u32 %v468, 16
        %v582 = vor.u32 %v579, %v580
        %v583 = vrot.slane %v579, 4
        %v585 = vshrl.u32 %v469, 16
        %v587 = vrot.slane %v585, 7
        %v588 = vshll.u32 %v469, 16
        %v590 = vor.u32 %v587, %v588
        %v591 = vsel %vm473, %v583, %v590
        %v592 = vrot.slane %v587, 4
        %v594 = vshrl.u32 %v470, 16
        %v596 = vrot.slane %v594, 7
        %v597 = vshll.u32 %v470, 16
        %v599 = vor.u32 %v596, %v597
        %v600 = vrot.slane %v596, 4
        %v602 = vshrl.u32 %v471, 16
        %v604 = vrot.slane %v602, 7
        %v605 = vshll.u32 %v471, 16
        %v607 = vor.u32 %v604, %v605
        %v608 = vsel %vm473, %v600, %v607
        %v609 = vrot.slane %v604, 4
        %s634 = scalar_lea.vmem [#allocation2], 12
        %vm635 = vcmask 27648
        %vm636 = vmand %vm635, %vm424
        %v637 = vld [vmem:[%s634] sm:$0xf]
        %v638 = vsel %vm636, %v480, %v637
        %639 = vst [vmem:[%s634] sm:$0xf] %v638
        %vm640 = vcmask 27648
        %641 = vst.msk [vmem:[%s634 + $0x4] sm:$0xf] %vm640, %v489
        %v642 = vld [vmem:[%s634 + $0x8] sm:$0x1]
        %v643 = vsel %vm393, %v490, %v642
        %644 = vst [vmem:[%s634 + $0x8] sm:$0x1] %v643
        %v645 = vld [vmem:[%s634 + $0xc] sm:$0xf]
        %v646 = vsel %vm636, %v497, %v645
        %647 = vst [vmem:[%s634 + $0xc] sm:$0xf] %v646
        %648 = vst.msk [vmem:[%s634 + $0x10] sm:$0xf] %vm640, %v506
        %v649 = vld [vmem:[%s634 + $0x14] sm:$0x1]
        %v650 = vsel %vm393, %v507, %v649
        %651 = vst [vmem:[%s634 + $0x14] sm:$0x1] %v650
        %v652 = vld [vmem:[%s634 + $0x18] sm:$0xf]
        %v653 = vsel %vm636, %v514, %v652
        %654 = vst [vmem:[%s634 + $0x18] sm:$0xf] %v653
        %655 = vst.msk [vmem:[%s634 + $0x1c] sm:$0xf] %vm640, %v523
        %v656 = vld [vmem:[%s634 + $0x20] sm:$0x1]
        %v657 = vsel %vm393, %v524, %v656
        %658 = vst [vmem:[%s634 + $0x20] sm:$0x1] %v657
        %v659 = vld [vmem:[%s634 + $0x24] sm:$0xf]
        %v660 = vsel %vm636, %v531, %v659
        %661 = vst [vmem:[%s634 + $0x24] sm:$0xf] %v660
        %662 = vst.msk [vmem:[%s634 + $0x28] sm:$0xf] %vm640, %v540
        %v663 = vld [vmem:[%s634 + $0x2c] sm:$0x1]
        %v664 = vsel %vm393, %v541, %v663
        %665 = vst [vmem:[%s634 + $0x2c] sm:$0x1] %v664
        %v666 = vld [vmem:[%s634 + $0x30] sm:$0xf]
        %v667 = vsel %vm636, %v548, %v666
        %668 = vst [vmem:[%s634 + $0x30] sm:$0xf] %v667
        %669 = vst.msk [vmem:[%s634 + $0x34] sm:$0xf] %vm640, %v557
        %v670 = vld [vmem:[%s634 + $0x38] sm:$0x1]
        %v671 = vsel %vm393, %v558, %v670
        %672 = vst [vmem:[%s634 + $0x38] sm:$0x1] %v671
        %v673 = vld [vmem:[%s634 + $0x3c] sm:$0xf]
        %v674 = vsel %vm636, %v565, %v673
        %675 = vst [vmem:[%s634 + $0x3c] sm:$0xf] %v674
        %676 = vst.msk [vmem:[%s634 + $0x40] sm:$0xf] %vm640, %v574
        %v677 = vld [vmem:[%s634 + $0x44] sm:$0x1]
        %v678 = vsel %vm393, %v575, %v677
        %679 = vst [vmem:[%s634 + $0x44] sm:$0x1] %v678
        %v680 = vld [vmem:[%s634 + $0x48] sm:$0xf]
        %v681 = vsel %vm636, %v582, %v680
        %682 = vst [vmem:[%s634 + $0x48] sm:$0xf] %v681
        %683 = vst.msk [vmem:[%s634 + $0x4c] sm:$0xf] %vm640, %v591
        %v684 = vld [vmem:[%s634 + $0x50] sm:$0x1]
        %v685 = vsel %vm393, %v592, %v684
        %686 = vst [vmem:[%s634 + $0x50] sm:$0x1] %v685
        %v687 = vld [vmem:[%s634 + $0x54] sm:$0xf]
        %v688 = vsel %vm636, %v599, %v687
        %689 = vst [vmem:[%s634 + $0x54] sm:$0xf] %v688
        %690 = vst.msk [vmem:[%s634 + $0x58] sm:$0xf] %vm640, %v608
        %v691 = vld [vmem:[%s634 + $0x5c] sm:$0x1]
        %v692 = vsel %vm393, %v609, %v691
        %693 = vst [vmem:[%s634 + $0x5c] sm:$0x1] %v692
        %s694 = smul.u32 %s25, 8
        %s695 = sadd.s32 %s694, 4294967295
        %p696 = scmp.ge.s32.totalorder %s695, 0
        // Predicated region
        $region41: #{tpu_custom_call.1} parent=39 // pred_check
          %p697 = pneg %p696
        $region42: #{tpu_custom_call.1} parent=39 // pred_check_branch
          %699 = sbr.rel (%p697) target = $region44
        $region43: #{tpu_custom_call.1} parent=39 // pred_region
          %v700 = vld [vmem:[%s367] sm:$0xf]
          %v701 = vld [vmem:[%s367 + $0x4] sm:$0xf]
          %v703 = vshrl.u32 %v700, 16
          %v705 = vrot.slane %v703, 7
          %v706 = vshll.u32 %v700, 16
          %v708 = vor.u32 %v705, %v706
          %v709 = vrot.slane %v705, 4
          %v711 = vshrl.u32 %v701, 16
          %v713 = vrot.slane %v711, 7
          %v714 = vshll.u32 %v701, 16
          %v716 = vor.u32 %v713, %v714
          %v717 = vsel %vm473, %v709, %v716
          %v718 = vrot.slane %v713, 4
          %v722 = vld [vmem:[#allocation2] sm:$0xf]
          %v723 = vsel %vm636, %v708, %v722
          %724 = vst [vmem:[#allocation2] sm:$0xf] %v723
          %725 = vst.msk [vmem:[#allocation2 + $0x4] sm:$0xf] %vm640, %v717
          %v726 = vld [vmem:[#allocation2 + $0x8] sm:$0x1]
          %v727 = vsel %vm393, %v718, %v726
          %728 = vst [vmem:[#allocation2 + $0x8] sm:$0x1] %v727
        $region44: #{tpu_custom_call.1} parent=39 // pred_fallthru
          _
        %p729 = scmp.lt.s32.totalorder %s695, 0
        // Predicated region
        $region45: #{tpu_custom_call.1} parent=39 // pred_check
          %p730 = pneg %p729
        $region46: #{tpu_custom_call.1} parent=39 // pred_check_branch
          %732 = sbr.rel (%p730) target = $region48
        $region47: #{tpu_custom_call.1} parent=39 // pred_region
          %v733 = vld [vmem:[#allocation2] sm:$0xf]
          %v734 = vsel %vm636, 0, %v733
          %735 = vst [vmem:[#allocation2] sm:$0xf] %v734
          %736 = vst.msk [vmem:[#allocation2 + $0x4] sm:$0xf] %vm640, 0
          %v737 = vld [vmem:[#allocation2 + $0x8] sm:$0x1]
          %v738 = vsel %vm393, 0, %v737
          %739 = vst [vmem:[#allocation2 + $0x8] sm:$0x1] %v738
        $region48: #{tpu_custom_call.1} parent=39 // pred_fallthru
          _
        %s740 = sadd.s32 %s25, 1
        %s741 = smul.u32 %s740, 8
        %p742 = scmp.lt.s32.totalorder %s741, 16
        // Predicated region
        $region49: #{tpu_custom_call.1} parent=39 // pred_check
          %p743 = pneg %p742
        $region50: #{tpu_custom_call.1} parent=39 // pred_check_branch
          %745 = sbr.rel (%p743) target = $region52
        $region51: #{tpu_custom_call.1} parent=39 // pred_region
          %v746 = vld [vmem:[%s384] sm:$0xf]
          %v747 = vld [vmem:[%s384 + $0x4] sm:$0xf]
          %v749 = vshrl.u32 %v746, 16
          %v751 = vrot.slane %v749, 7
          %v752 = vshll.u32 %v746, 16
          %v754 = vor.u32 %v751, %v752
          %v755 = vrot.slane %v751, 4
          %v757 = vshrl.u32 %v747, 16
          %v759 = vrot.slane %v757, 7
          %v760 = vshll.u32 %v747, 16
          %v762 = vor.u32 %v759, %v760
          %v763 = vsel %vm473, %v755, %v762
          %v764 = vrot.slane %v759, 4
          %s768 = scalar_lea.vmem [#allocation2], 108
          %v769 = vld [vmem:[%s768] sm:$0xf]
          %v770 = vsel %vm636, %v754, %v769
          %771 = vst [vmem:[%s768] sm:$0xf] %v770
          %772 = vst.msk [vmem:[%s768 + $0x4] sm:$0xf] %vm640, %v763
          %v773 = vld [vmem:[%s768 + $0x8] sm:$0x1]
          %v774 = vsel %vm393, %v764, %v773
          %775 = vst [vmem:[%s768 + $0x8] sm:$0x1] %v774
        $region52: #{tpu_custom_call.1} parent=39 // pred_fallthru
          _
        %p776 = scmp.ge.s32.totalorder %s741, 16
        // Predicated region
        $region53: #{tpu_custom_call.1} parent=39 // pred_check
          %p777 = pneg %p776
        $region54: #{tpu_custom_call.1} parent=39 // pred_check_branch
          %779 = sbr.rel (%p777) target = $region56
        $region55: #{tpu_custom_call.1} parent=39 // pred_region
          %s780 = scalar_lea.vmem [#allocation2], 108
          %v781 = vld [vmem:[%s780] sm:$0xf]
          %v782 = vsel %vm636, 0, %v781
          %783 = vst [vmem:[%s780] sm:$0xf] %v782
          %784 = vst.msk [vmem:[%s780 + $0x4] sm:$0xf] %vm640, 0
          %v785 = vld [vmem:[%s780 + $0x8] sm:$0x1]
          %v786 = vsel %vm393, 0, %v785
          %787 = vst [vmem:[%s780 + $0x8] sm:$0x1] %v786
        $region56: #{tpu_custom_call.1} parent=39 // pred_fallthru
          _
        %vm788 = vcmask 1047840
        %789 = vst.msk [vmem:[#allocation3] sm:$0xff] %vm788, 0
        %790 = vst.msk [vmem:[#allocation3 + $0x8] sm:$0xff] %vm788, 0
        %791 = vst.msk [vmem:[#allocation3 + $0x10] sm:$0xff] %vm788, 0
        %792 = vst.msk [vmem:[#allocation3 + $0x18] sm:$0xff] %vm788, 0
        %793 = vst.msk [vmem:[#allocation3 + $0x20] sm:$0xff] %vm788, 0
        %794 = vst.msk [vmem:[#allocation3 + $0x28] sm:$0xff] %vm788, 0
        %795 = vst.msk [vmem:[#allocation3 + $0x30] sm:$0xff] %vm788, 0
        %796 = vst.msk [vmem:[#allocation3 + $0x38] sm:$0xff] %vm788, 0
        %v797 = vld [vmem:[#allocation2] sm:$0xf]
        %v798 = vld [vmem:[#allocation2 + $0x4] sm:$0xf]
        %v799 = vld [vmem:[#allocation2 + $0xc] sm:$0xf]
        %v800 = vld [vmem:[#allocation2 + $0x10] sm:$0xf]
        %v801 = vld [vmem:[#allocation2 + $0x18] sm:$0xf]
        %v802 = vld [vmem:[#allocation2 + $0x1c] sm:$0xf]
        %v803 = vld [vmem:[#allocation2 + $0x24] sm:$0xf]
        %v804 = vld [vmem:[#allocation2 + $0x28] sm:$0xf]
        %v805 = vld [vmem:[#allocation2 + $0x30] sm:$0xf]
        %v806 = vld [vmem:[#allocation2 + $0x34] sm:$0xf]
        %v807 = vld [vmem:[#allocation2 + $0x3c] sm:$0xf]
        %v808 = vld [vmem:[#allocation2 + $0x40] sm:$0xf]
        %v809 = vld [vmem:[#allocation2 + $0x48] sm:$0xf]
        %v810 = vld [vmem:[#allocation2 + $0x4c] sm:$0xf]
        %v811 = vld [vmem:[#allocation2 + $0x54] sm:$0xf]
        %v812 = vld [vmem:[#allocation2 + $0x58] sm:$0xf]
        %v829 = vunpack.c.l.b16 %v797
        %v830 = vunpack.c.l.b16 %v798
        %v831 = vunpack.c.l.b16 %v799
        %v832 = vunpack.c.l.b16 %v800
        %v833 = vunpack.c.l.b16 %v801
        %v834 = vunpack.c.l.b16 %v802
        %v835 = vunpack.c.l.b16 %v803
        %v836 = vunpack.c.l.b16 %v804
        %v837 = vunpack.c.l.b16 %v805
        %v838 = vunpack.c.l.b16 %v806
        %v839 = vunpack.c.l.b16 %v807
        %v840 = vunpack.c.l.b16 %v808
        %v841 = vunpack.c.l.b16 %v809
        %v842 = vunpack.c.l.b16 %v810
        %v843 = vunpack.c.l.b16 %v811
        %v844 = vunpack.c.l.b16 %v812
        %v845 = vpack.c.b16 %v830, %v829
        %v846 = vpack.c.b16 %v832, %v831
        %v847 = vpack.c.b16 %v834, %v833
        %v848 = vpack.c.b16 %v836, %v835
        %v849 = vpack.c.b16 %v838, %v837
        %v850 = vpack.c.b16 %v840, %v839
        %v851 = vpack.c.b16 %v842, %v841
        %v852 = vpack.c.b16 %v844, %v843
        %vm861 = vcmask 31744
        %862 = vst.msk [vmem:[#allocation3] sm:$0xff] %vm861, %v845
        %863 = vst.msk [vmem:[#allocation3 + $0x8] sm:$0xff] %vm861, %v846
        %864 = vst.msk [vmem:[#allocation3 + $0x10] sm:$0xff] %vm861, %v847
        %865 = vst.msk [vmem:[#allocation3 + $0x18] sm:$0xff] %vm861, %v848
        %866 = vst.msk [vmem:[#allocation3 + $0x20] sm:$0xff] %vm861, %v849
        %867 = vst.msk [vmem:[#allocation3 + $0x28] sm:$0xff] %vm861, %v850
        %868 = vst.msk [vmem:[#allocation3 + $0x30] sm:$0xff] %vm861, %v851
        %869 = vst.msk [vmem:[#allocation3 + $0x38] sm:$0xff] %vm861, %v852
        %v870 = vld [vmem:[#allocation2] sm:$0xf]
        %v871 = vld [vmem:[#allocation2 + $0x4] sm:$0xf]
        %v872 = vld [vmem:[#allocation2 + $0x8] sm:$0x1]
        %v873 = vld [vmem:[#allocation2 + $0xc] sm:$0xf]
        %v874 = vld [vmem:[#allocation2 + $0x10] sm:$0xf]
        %v875 = vld [vmem:[#allocation2 + $0x14] sm:$0x1]
        %v876 = vld [vmem:[#allocation2 + $0x18] sm:$0xf]
        %v877 = vld [vmem:[#allocation2 + $0x1c] sm:$0xf]
        %v878 = vld [vmem:[#allocation2 + $0x20] sm:$0x1]
        %v879 = vld [vmem:[#allocation2 + $0x24] sm:$0xf]
        %v880 = vld [vmem:[#allocation2 + $0x28] sm:$0xf]
        %v881 = vld [vmem:[#allocation2 + $0x2c] sm:$0x1]
        %v882 = vld [vmem:[#allocation2 + $0x30] sm:$0xf]
        %v883 = vld [vmem:[#allocation2 + $0x34] sm:$0xf]
        %v884 = vld [vmem:[#allocation2 + $0x38] sm:$0x1]
        %v885 = vld [vmem:[#allocation2 + $0x3c] sm:$0xf]
        %v886 = vld [vmem:[#allocation2 + $0x40] sm:$0xf]
        %v887 = vld [vmem:[#allocation2 + $0x44] sm:$0x1]
        %v888 = vld [vmem:[#allocation2 + $0x48] sm:$0xf]
        %v889 = vld [vmem:[#allocation2 + $0x4c] sm:$0xf]
        %v890 = vld [vmem:[#allocation2 + $0x50] sm:$0x1]
        %v891 = vld [vmem:[#allocation2 + $0x54] sm:$0xf]
        %v892 = vld [vmem:[#allocation2 + $0x58] sm:$0xf]
        %v893 = vld [vmem:[#allocation2 + $0x5c] sm:$0x1]
        %v918 = vunpack.c.l.b16 %v870
        %v919 = vunpack.c.l.b16 %v871
        %v920 = vunpack.c.l.b16 %v872
        %v921 = vunpack.c.l.b16 %v873
        %v922 = vunpack.c.l.b16 %v874
        %v923 = vunpack.c.l.b16 %v875
        %v924 = vunpack.c.l.b16 %v876
        %v925 = vunpack.c.l.b16 %v877
        %v926 = vunpack.c.l.b16 %v878
        %v927 = vunpack.c.l.b16 %v879
        %v928 = vunpack.c.l.b16 %v880
        %v929 = vunpack.c.l.b16 %v881
        %v930 = vunpack.c.l.b16 %v882
        %v931 = vunpack.c.l.b16 %v883
        %v932 = vunpack.c.l.b16 %v884
        %v933 = vunpack.c.l.b16 %v885
        %v934 = vunpack.c.l.b16 %v886
        %v935 = vunpack.c.l.b16 %v887
        %v936 = vunpack.c.l.b16 %v888
        %v937 = vunpack.c.l.b16 %v889
        %v938 = vunpack.c.l.b16 %v890
        %v939 = vunpack.c.l.b16 %v891
        %v940 = vunpack.c.l.b16 %v892
        %v941 = vunpack.c.l.b16 %v893
        %v942 = vpack.c.b16 %v919, %v918
        %v943 = vpack.c.b16 %v920, %v920
        %v944 = vpack.c.b16 %v922, %v921
        %v945 = vpack.c.b16 %v923, %v923
        %v946 = vpack.c.b16 %v925, %v924
        %v947 = vpack.c.b16 %v926, %v926
        %v948 = vpack.c.b16 %v928, %v927
        %v949 = vpack.c.b16 %v929, %v929
        %v950 = vpack.c.b16 %v931, %v930
        %v951 = vpack.c.b16 %v932, %v932
        %v952 = vpack.c.b16 %v934, %v933
        %v953 = vpack.c.b16 %v935, %v935
        %v954 = vpack.c.b16 %v937, %v936
        %v955 = vpack.c.b16 %v938, %v938
        %v956 = vpack.c.b16 %v940, %v939
        %v957 = vpack.c.b16 %v941, %v941
        %vm958 = vsmask.f32 7424
        %v960 = vshrl.u32 %v942, 16
        %v962 = vshll.u32 %v942, 16
        %v964 = vrot.slane %v962, 1
        %v965 = vor.u32 %v960, %v964
        %v967 = vshll.u32 %v943, 16
        %v969 = vrot.slane %v967, 1
        %v970 = vsel %vm958, %v965, %v969
        %v972 = vshrl.u32 %v944, 16
        %v974 = vshll.u32 %v944, 16
        %v976 = vrot.slane %v974, 1
        %v977 = vor.u32 %v972, %v976
        %v979 = vshll.u32 %v945, 16
        %v981 = vrot.slane %v979, 1
        %v982 = vsel %vm958, %v977, %v981
        %v984 = vshrl.u32 %v946, 16
        %v986 = vshll.u32 %v946, 16
        %v988 = vrot.slane %v986, 1
        %v989 = vor.u32 %v984, %v988
        %v991 = vshll.u32 %v947, 16
        %v993 = vrot.slane %v991, 1
        %v994 = vsel %vm958, %v989, %v993
        %v996 = vshrl.u32 %v948, 16
        %v998 = vshll.u32 %v948, 16
        %v1000 = vrot.slane %v998, 1
        %v1001 = vor.u32 %v996, %v1000
        %v1003 = vshll.u32 %v949, 16
        %v1005 = vrot.slane %v1003, 1
        %v1006 = vsel %vm958, %v1001, %v1005
        %v1008 = vshrl.u32 %v950, 16
        %v1010 = vshll.u32 %v950, 16
        %v1012 = vrot.slane %v1010, 1
        %v1013 = vor.u32 %v1008, %v1012
        %v1015 = vshll.u32 %v951, 16
        %v1017 = vrot.slane %v1015, 1
        %v1018 = vsel %vm958, %v1013, %v1017
        %v1020 = vshrl.u32 %v952, 16
        %v1022 = vshll.u32 %v952, 16
        %v1024 = vrot.slane %v1022, 1
        %v1025 = vor.u32 %v1020, %v1024
        %v1027 = vshll.u32 %v953, 16
        %v1029 = vrot.slane %v1027, 1
        %v1030 = vsel %vm958, %v1025, %v1029
        %v1032 = vshrl.u32 %v954, 16
        %v1034 = vshll.u32 %v954, 16
        %v1036 = vrot.slane %v1034, 1
        %v1037 = vor.u32 %v1032, %v1036
        %v1039 = vshll.u32 %v955, 16
        %v1041 = vrot.slane %v1039, 1
        %v1042 = vsel %vm958, %v1037, %v1041
        %v1044 = vshrl.u32 %v956, 16
        %v1046 = vshll.u32 %v956, 16
        %v1048 = vrot.slane %v1046, 1
        %v1049 = vor.u32 %v1044, %v1048
        %v1051 = vshll.u32 %v957, 16
        %v1053 = vrot.slane %v1051, 1
        %v1054 = vsel %vm958, %v1049, %v1053
        %1055 = vrot.lane.b32.xlu0 %v970, 4
        %v1056 = vpop.permute.xlu0 %1055
        %1057 = vrot.lane.b32.xlu0 %v982, 4
        %v1058 = vpop.permute.xlu0 %1057
        %1059 = vrot.lane.b32.xlu0 %v994, 4
        %v1060 = vpop.permute.xlu0 %1059
        %1061 = vrot.lane.b32.xlu0 %v1006, 4
        %v1062 = vpop.permute.xlu0 %1061
        %1063 = vrot.lane.b32.xlu0 %v1018, 4
        %v1064 = vpop.permute.xlu0 %1063
        %1065 = vrot.lane.b32.xlu0 %v1030, 4
        %v1066 = vpop.permute.xlu0 %1065
        %1067 = vrot.lane.b32.xlu0 %v1042, 4
        %v1068 = vpop.permute.xlu0 %1067
        %1069 = vrot.lane.b32.xlu0 %v1054, 4
        %v1070 = vpop.permute.xlu0 %1069
        %vm1079 = vcmask 64544
        %1080 = vst.msk [vmem:[#allocation3] sm:$0xff] %vm1079, %v1056
        %1081 = vst.msk [vmem:[#allocation3 + $0x8] sm:$0xff] %vm1079, %v1058
        %1082 = vst.msk [vmem:[#allocation3 + $0x10] sm:$0xff] %vm1079, %v1060
        %1083 = vst.msk [vmem:[#allocation3 + $0x18] sm:$0xff] %vm1079, %v1062
        %1084 = vst.msk [vmem:[#allocation3 + $0x20] sm:$0xff] %vm1079, %v1064
        %1085 = vst.msk [vmem:[#allocation3 + $0x28] sm:$0xff] %vm1079, %v1066
        %1086 = vst.msk [vmem:[#allocation3 + $0x30] sm:$0xff] %vm1079, %v1068
        %1087 = vst.msk [vmem:[#allocation3 + $0x38] sm:$0xff] %vm1079, %v1070
        %v1088 = vld [vmem:[#allocation2] sm:$0xe]
        %v1089 = vld [vmem:[#allocation2 + $0x4] sm:$0xf]
        %v1090 = vld [vmem:[#allocation2 + $0x8] sm:$0x1]
        %v1091 = vld [vmem:[#allocation2 + $0xc] sm:$0xe]
        %v1092 = vld [vmem:[#allocation2 + $0x10] sm:$0xf]
        %v1093 = vld [vmem:[#allocation2 + $0x14] sm:$0x1]
        %v1094 = vld [vmem:[#allocation2 + $0x18] sm:$0xe]
        %v1095 = vld [vmem:[#allocation2 + $0x1c] sm:$0xf]
        %v1096 = vld [vmem:[#allocation2 + $0x20] sm:$0x1]
        %v1097 = vld [vmem:[#allocation2 + $0x24] sm:$0xe]
        %v1098 = vld [vmem:[#allocation2 + $0x28] sm:$0xf]
        %v1099 = vld [vmem:[#allocation2 + $0x2c] sm:$0x1]
        %v1100 = vld [vmem:[#allocation2 + $0x30] sm:$0xe]
        %v1101 = vld [vmem:[#allocation2 + $0x34] sm:$0xf]
        %v1102 = vld [vmem:[#allocation2 + $0x38] sm:$0x1]
        %v1103 = vld [vmem:[#allocation2 + $0x3c] sm:$0xe]
        %v1104 = vld [vmem:[#allocation2 + $0x40] sm:$0xf]
        %v1105 = vld [vmem:[#allocation2 + $0x44] sm:$0x1]
        %v1106 = vld [vmem:[#allocation2 + $0x48] sm:$0xe]
        %v1107 = vld [vmem:[#allocation2 + $0x4c] sm:$0xf]
        %v1108 = vld [vmem:[#allocation2 + $0x50] sm:$0x1]
        %v1109 = vld [vmem:[#allocation2 + $0x54] sm:$0xe]
        %v1110 = vld [vmem:[#allocation2 + $0x58] sm:$0xf]
        %v1111 = vld [vmem:[#allocation2 + $0x5c] sm:$0x1]
        %v1136 = vunpack.c.l.b16 %v1088
        %v1137 = vunpack.c.l.b16 %v1089
        %v1138 = vunpack.c.l.b16 %v1090
        %v1139 = vunpack.c.l.b16 %v1091
        %v1140 = vunpack.c.l.b16 %v1092
        %v1141 = vunpack.c.l.b16 %v1093
        %v1142 = vunpack.c.l.b16 %v1094
        %v1143 = vunpack.c.l.b16 %v1095
        %v1144 = vunpack.c.l.b16 %v1096
        %v1145 = vunpack.c.l.b16 %v1097
        %v1146 = vunpack.c.l.b16 %v1098
        %v1147 = vunpack.c.l.b16 %v1099
        %v1148 = vunpack.c.l.b16 %v1100
        %v1149 = vunpack.c.l.b16 %v1101
        %v1150 = vunpack.c.l.b16 %v1102
        %v1151 = vunpack.c.l.b16 %v1103
        %v1152 = vunpack.c.l.b16 %v1104
        %v1153 = vunpack.c.l.b16 %v1105
        %v1154 = vunpack.c.l.b16 %v1106
        %v1155 = vunpack.c.l.b16 %v1107
        %v1156 = vunpack.c.l.b16 %v1108
        %v1157 = vunpack.c.l.b16 %v1109
        %v1158 = vunpack.c.l.b16 %v1110
        %v1159 = vunpack.c.l.b16 %v1111
        %v1160 = vpack.c.b16 %v1137, %v1136
        %v1161 = vpack.c.b16 %v1138, %v1138
        %v1162 = vpack.c.b16 %v1140, %v1139
        %v1163 = vpack.c.b16 %v1141, %v1141
        %v1164 = vpack.c.b16 %v1143, %v1142
        %v1165 = vpack.c.b16 %v1144, %v1144
        %v1166 = vpack.c.b16 %v1146, %v1145
        %v1167 = vpack.c.b16 %v1147, %v1147
        %v1168 = vpack.c.b16 %v1149, %v1148
        %v1169 = vpack.c.b16 %v1150, %v1150
        %v1170 = vpack.c.b16 %v1152, %v1151
        %v1171 = vpack.c.b16 %v1153, %v1153
        %v1172 = vpack.c.b16 %v1155, %v1154
        %v1173 = vpack.c.b16 %v1156, %v1156
        %v1174 = vpack.c.b16 %v1158, %v1157
        %v1175 = vpack.c.b16 %v1159, %v1159
        %vm1176 = vcmask 1046528
        %v1177 = vrot.slane %v1160, 1
        %v1178 = vrot.slane %v1161, 1
        %v1179 = vsel %vm1176, %v1177, %v1178
        %v1180 = vrot.slane %v1162, 1
        %v1181 = vrot.slane %v1163, 1
        %v1182 = vsel %vm1176, %v1180, %v1181
        %v1183 = vrot.slane %v1164, 1
        %v1184 = vrot.slane %v1165, 1
        %v1185 = vsel %vm1176, %v1183, %v1184
        %v1186 = vrot.slane %v1166, 1
        %v1187 = vrot.slane %v1167, 1
        %v1188 = vsel %vm1176, %v1186, %v1187
        %v1189 = vrot.slane %v1168, 1
        %v1190 = vrot.slane %v1169, 1
        %v1191 = vsel %vm1176, %v1189, %v1190
        %v1192 = vrot.slane %v1170, 1
        %v1193 = vrot.slane %v1171, 1
        %v1194 = vsel %vm1176, %v1192, %v1193
        %v1195 = vrot.slane %v1172, 1
        %v1196 = vrot.slane %v1173, 1
        %v1197 = vsel %vm1176, %v1195, %v1196
        %v1198 = vrot.slane %v1174, 1
        %v1199 = vrot.slane %v1175, 1
        %v1200 = vsel %vm1176, %v1198, %v1199
        %1201 = vrot.lane.b32.xlu0 %v1179, 8
        %v1202 = vpop.permute.xlu0 %1201
        %1203 = vrot.lane.b32.xlu0 %v1182, 8
        %v1204 = vpop.permute.xlu0 %1203
        %1205 = vrot.lane.b32.xlu0 %v1185, 8
        %v1206 = vpop.permute.xlu0 %1205
        %1207 = vrot.lane.b32.xlu0 %v1188, 8
        %v1208 = vpop.permute.xlu0 %1207
        %1209 = vrot.lane.b32.xlu0 %v1191, 8
        %v1210 = vpop.permute.xlu0 %1209
        %1211 = vrot.lane.b32.xlu0 %v1194, 8
        %v1212 = vpop.permute.xlu0 %1211
        %1213 = vrot.lane.b32.xlu0 %v1197, 8
        %v1214 = vpop.permute.xlu0 %1213
        %1215 = vrot.lane.b32.xlu0 %v1200, 8
        %v1216 = vpop.permute.xlu0 %1215
        %vm1225 = vcmask 97344
        %1226 = vst.msk [vmem:[#allocation3] sm:$0xff] %vm1225, %v1202
        %1227 = vst.msk [vmem:[#allocation3 + $0x8] sm:$0xff] %vm1225, %v1204
        %1228 = vst.msk [vmem:[#allocation3 + $0x10] sm:$0xff] %vm1225, %v1206
        %1229 = vst.msk [vmem:[#allocation3 + $0x18] sm:$0xff] %vm1225, %v1208
        %1230 = vst.msk [vmem:[#allocation3 + $0x20] sm:$0xff] %vm1225, %v1210
        %1231 = vst.msk [vmem:[#allocation3 + $0x28] sm:$0xff] %vm1225, %v1212
        %1232 = vst.msk [vmem:[#allocation3 + $0x30] sm:$0xff] %vm1225, %v1214
        %1233 = vst.msk [vmem:[#allocation3 + $0x38] sm:$0xff] %vm1225, %v1216
        %v1234 = vld [vmem:[%s634] sm:$0xf]
        %v1235 = vld [vmem:[%s634 + $0x4] sm:$0xf]
        %v1236 = vld [vmem:[%s634 + $0xc] sm:$0xf]
        %v1237 = vld [vmem:[%s634 + $0x10] sm:$0xf]
        %v1238 = vld [vmem:[%s634 + $0x18] sm:$0xf]
        %v1239 = vld [vmem:[%s634 + $0x1c] sm:$0xf]
        %v1240 = vld [vmem:[%s634 + $0x24] sm:$0xf]
        %v1241 = vld [vmem:[%s634 + $0x28] sm:$0xf]
        %v1242 = vld [vmem:[%s634 + $0x30] sm:$0xf]
        %v1243 = vld [vmem:[%s634 + $0x34] sm:$0xf]
        %v1244 = vld [vmem:[%s634 + $0x3c] sm:$0xf]
        %v1245 = vld [vmem:[%s634 + $0x40] sm:$0xf]
        %v1246 = vld [vmem:[%s634 + $0x48] sm:$0xf]
        %v1247 = vld [vmem:[%s634 + $0x4c] sm:$0xf]
        %v1248 = vld [vmem:[%s634 + $0x54] sm:$0xf]
        %v1249 = vld [vmem:[%s634 + $0x58] sm:$0xf]
        %v1266 = vunpack.c.l.b16 %v1234
        %v1267 = vunpack.c.l.b16 %v1235
        %v1268 = vunpack.c.l.b16 %v1236
        %v1269 = vunpack.c.l.b16 %v1237
        %v1270 = vunpack.c.l.b16 %v1238
        %v1271 = vunpack.c.l.b16 %v1239
        %v1272 = vunpack.c.l.b16 %v1240
        %v1273 = vunpack.c.l.b16 %v1241
        %v1274 = vunpack.c.l.b16 %v1242
        %v1275 = vunpack.c.l.b16 %v1243
        %v1276 = vunpack.c.l.b16 %v1244
        %v1277 = vunpack.c.l.b16 %v1245
        %v1278 = vunpack.c.l.b16 %v1246
        %v1279 = vunpack.c.l.b16 %v1247
        %v1280 = vunpack.c.l.b16 %v1248
        %v1281 = vunpack.c.l.b16 %v1249
        %v1282 = vpack.c.b16 %v1267, %v1266
        %v1283 = vpack.c.b16 %v1269, %v1268
        %v1284 = vpack.c.b16 %v1271, %v1270
        %v1285 = vpack.c.b16 %v1273, %v1272
        %v1286 = vpack.c.b16 %v1275, %v1274
        %v1287 = vpack.c.b16 %v1277, %v1276
        %v1288 = vpack.c.b16 %v1279, %v1278
        %v1289 = vpack.c.b16 %v1281, %v1280
        %1290 = vrot.lane.b32.xlu0 %v1282, 12
        %v1291 = vpop.permute.xlu0 %1290
        %1292 = vrot.lane.b32.xlu0 %v1283, 12
        %v1293 = vpop.permute.xlu0 %1292
        %1294 = vrot.lane.b32.xlu0 %v1284, 12
        %v1295 = vpop.permute.xlu0 %1294
        %1296 = vrot.lane.b32.xlu0 %v1285, 12
        %v1297 = vpop.permute.xlu0 %1296
        %1298 = vrot.lane.b32.xlu0 %v1286, 12
        %v1299 = vpop.permute.xlu0 %1298
        %1300 = vrot.lane.b32.xlu0 %v1287, 12
        %v1301 = vpop.permute.xlu0 %1300
        %1302 = vrot.lane.b32.xlu0 %v1288, 12
        %v1303 = vpop.permute.xlu0 %1302
        %1304 = vrot.lane.b32.xlu0 %v1289, 12
        %v1305 = vpop.permute.xlu0 %1304
        %vm1314 = vcmask 130144
        %1315 = vst.msk [vmem:[#allocation3] sm:$0xff] %vm1314, %v1291
        %1316 = vst.msk [vmem:[#allocation3 + $0x8] sm:$0xff] %vm1314, %v1293
        %1317 = vst.msk [vmem:[#allocation3 + $0x10] sm:$0xff] %vm1314, %v1295
        %1318 = vst.msk [vmem:[#allocation3 + $0x18] sm:$0xff] %vm1314, %v1297
        %1319 = vst.msk [vmem:[#allocation3 + $0x20] sm:$0xff] %vm1314, %v1299
        %1320 = vst.msk [vmem:[#allocation3 + $0x28] sm:$0xff] %vm1314, %v1301
        %1321 = vst.msk [vmem:[#allocation3 + $0x30] sm:$0xff] %vm1314, %v1303
        %1322 = vst.msk [vmem:[#allocation3 + $0x38] sm:$0xff] %vm1314, %v1305
        %v1323 = vld [vmem:[%s634] sm:$0xf]
        %v1324 = vld [vmem:[%s634 + $0x4] sm:$0xf]
        %v1325 = vld [vmem:[%s634 + $0x8] sm:$0x1]
        %v1326 = vld [vmem:[%s634 + $0xc] sm:$0xf]
        %v1327 = vld [vmem:[%s634 + $0x10] sm:$0xf]
        %v1328 = vld [vmem:[%s634 + $0x14] sm:$0x1]
        %v1329 = vld [vmem:[%s634 + $0x18] sm:$0xf]
        %v1330 = vld [vmem:[%s634 + $0x1c] sm:$0xf]
        %v1331 = vld [vmem:[%s634 + $0x20] sm:$0x1]
        %v1332 = vld [vmem:[%s634 + $0x24] sm:$0xf]
        %v1333 = vld [vmem:[%s634 + $0x28] sm:$0xf]
        %v1334 = vld [vmem:[%s634 + $0x2c] sm:$0x1]
        %v1335 = vld [vmem:[%s634 + $0x30] sm:$0xf]
        %v1336 = vld [vmem:[%s634 + $0x34] sm:$0xf]
        %v1337 = vld [vmem:[%s634 + $0x38] sm:$0x1]
        %v1338 = vld [vmem:[%s634 + $0x3c] sm:$0xf]
        %v1339 = vld [vmem:[%s634 + $0x40] sm:$0xf]
        %v1340 = vld [vmem:[%s634 + $0x44] sm:$0x1]
        %v1341 = vld [vmem:[%s634 + $0x48] sm:$0xf]
        %v1342 = vld [vmem:[%s634 + $0x4c] sm:$0xf]
        %v1343 = vld [vmem:[%s634 + $0x50] sm:$0x1]
        %v1344 = vld [vmem:[%s634 + $0x54] sm:$0xf]
        %v1345 = vld [vmem:[%s634 + $0x58] sm:$0xf]
        %v1346 = vld [vmem:[%s634 + $0x5c] sm:$0x1]
        %v1371 = vunpack.c.l.b16 %v1323
        %v1372 = vunpack.c.l.b16 %v1324
        %v1373 = vunpack.c.l.b16 %v1325
        %v1374 = vunpack.c.l.b16 %v1326
        %v1375 = vunpack.c.l.b16 %v1327
        %v1376 = vunpack.c.l.b16 %v1328
        %v1377 = vunpack.c.l.b16 %v1329
        %v1378 = vunpack.c.l.b16 %v1330
        %v1379 = vunpack.c.l.b16 %v1331
        %v1380 = vunpack.c.l.b16 %v1332
        %v1381 = vunpack.c.l.b16 %v1333
        %v1382 = vunpack.c.l.b16 %v1334
        %v1383 = vunpack.c.l.b16 %v1335
        %v1384 = vunpack.c.l.b16 %v1336
        %v1385 = vunpack.c.l.b16 %v1337
        %v1386 = vunpack.c.l.b16 %v1338
        %v1387 = vunpack.c.l.b16 %v1339
        %v1388 = vunpack.c.l.b16 %v1340
        %v1389 = vunpack.c.l.b16 %v1341
        %v1390 = vunpack.c.l.b16 %v1342
        %v1391 = vunpack.c.l.b16 %v1343
        %v1392 = vunpack.c.l.b16 %v1344
        %v1393 = vunpack.c.l.b16 %v1345
        %v1394 = vunpack.c.l.b16 %v1346
        %v1395 = vpack.c.b16 %v1372, %v1371
        %v1396 = vpack.c.b16 %v1373, %v1373
        %v1397 = vpack.c.b16 %v1375, %v1374
        %v1398 = vpack.c.b16 %v1376, %v1376
        %v1399 = vpack.c.b16 %v1378, %v1377
        %v1400 = vpack.c.b16 %v1379, %v1379
        %v1401 = vpack.c.b16 %v1381, %v1380
        %v1402 = vpack.c.b16 %v1382, %v1382
        %v1403 = vpack.c.b16 %v1384, %v1383
        %v1404 = vpack.c.b16 %v1385, %v1385
        %v1405 = vpack.c.b16 %v1387, %v1386
        %v1406 = vpack.c.b16 %v1388, %v1388
        %v1407 = vpack.c.b16 %v1390, %v1389
        %v1408 = vpack.c.b16 %v1391, %v1391
        %v1409 = vpack.c.b16 %v1393, %v1392
        %v1410 = vpack.c.b16 %v1394, %v1394
        %v1412 = vshrl.u32 %v1395, 16
        %v1414 = vshll.u32 %v1395, 16
        %v1416 = vrot.slane %v1414, 1
        %v1417 = vor.u32 %v1412, %v1416
        %v1419 = vshll.u32 %v1396, 16
        %v1421 = vrot.slane %v1419, 1
        %v1422 = vsel %vm958, %v1417, %v1421
        %v1424 = vshrl.u32 %v1397, 16
        %v1426 = vshll.u32 %v1397, 16
        %v1428 = vrot.slane %v1426, 1
        %v1429 = vor.u32 %v1424, %v1428
        %v1431 = vshll.u32 %v1398, 16
        %v1433 = vrot.slane %v1431, 1
        %v1434 = vsel %vm958, %v1429, %v1433
        %v1436 = vshrl.u32 %v1399, 16
        %v1438 = vshll.u32 %v1399, 16
        %v1440 = vrot.slane %v1438, 1
        %v1441 = vor.u32 %v1436, %v1440
        %v1443 = vshll.u32 %v1400, 16
        %v1445 = vrot.slane %v1443, 1
        %v1446 = vsel %vm958, %v1441, %v1445
        %v1448 = vshrl.u32 %v1401, 16
        %v1450 = vshll.u32 %v1401, 16
        %v1452 = vrot.slane %v1450, 1
        %v1453 = vor.u32 %v1448, %v1452
        %v1455 = vshll.u32 %v1402, 16
        %v1457 = vrot.slane %v1455, 1
        %v1458 = vsel %vm958, %v1453, %v1457
        %v1460 = vshrl.u32 %v1403, 16
        %v1462 = vshll.u32 %v1403, 16
        %v1464 = vrot.slane %v1462, 1
        %v1465 = vor.u32 %v1460, %v1464
        %v1467 = vshll.u32 %v1404, 16
        %v1469 = vrot.slane %v1467, 1
        %v1470 = vsel %vm958, %v1465, %v1469
        %v1472 = vshrl.u32 %v1405, 16
        %v1474 = vshll.u32 %v1405, 16
        %v1476 = vrot.slane %v1474, 1
        %v1477 = vor.u32 %v1472, %v1476
        %v1479 = vshll.u32 %v1406, 16
        %v1481 = vrot.slane %v1479, 1
        %v1482 = vsel %vm958, %v1477, %v1481
        %v1484 = vshrl.u32 %v1407, 16
        %v1486 = vshll.u32 %v1407, 16
        %v1488 = vrot.slane %v1486, 1
        %v1489 = vor.u32 %v1484, %v1488
        %v1491 = vshll.u32 %v1408, 16
        %v1493 = vrot.slane %v1491, 1
        %v1494 = vsel %vm958, %v1489, %v1493
        %v1496 = vshrl.u32 %v1409, 16
        %v1498 = vshll.u32 %v1409, 16
        %v1500 = vrot.slane %v1498, 1
        %v1501 = vor.u32 %v1496, %v1500
        %v1503 = vshll.u32 %v1410, 16
        %v1505 = vrot.slane %v1503, 1
        %v1506 = vsel %vm958, %v1501, %v1505
        %1507 = vrot.lane.b32.xlu0 %v1422, 16
        %v1508 = vpop.permute.xlu0 %1507
        %1509 = vrot.lane.b32.xlu0 %v1434, 16
        %v1510 = vpop.permute.xlu0 %1509
        %1511 = vrot.lane.b32.xlu0 %v1446, 16
        %v1512 = vpop.permute.xlu0 %1511
        %1513 = vrot.lane.b32.xlu0 %v1458, 16
        %v1514 = vpop.permute.xlu0 %1513
        %1515 = vrot.lane.b32.xlu0 %v1470, 16
        %v1516 = vpop.permute.xlu0 %1515
        %1517 = vrot.lane.b32.xlu0 %v1482, 16
        %v1518 = vpop.permute.xlu0 %1517
        %1519 = vrot.lane.b32.xlu0 %v1494, 16
        %v1520 = vpop.permute.xlu0 %1519
        %1521 = vrot.lane.b32.xlu0 %v1506, 16
        %v1522 = vpop.permute.xlu0 %1521
        %vm1531 = vcmask 162944
        %1532 = vst.msk [vmem:[#allocation3] sm:$0xff] %vm1531, %v1508
        %1533 = vst.msk [vmem:[#allocation3 + $0x8] sm:$0xff] %vm1531, %v1510
        %1534 = vst.msk [vmem:[#allocation3 + $0x10] sm:$0xff] %vm1531, %v1512
        %1535 = vst.msk [vmem:[#allocation3 + $0x18] sm:$0xff] %vm1531, %v1514
        %1536 = vst.msk [vmem:[#allocation3 + $0x20] sm:$0xff] %vm1531, %v1516
        %1537 = vst.msk [vmem:[#allocation3 + $0x28] sm:$0xff] %vm1531, %v1518
        %1538 = vst.msk [vmem:[#allocation3 + $0x30] sm:$0xff] %vm1531, %v1520
        %1539 = vst.msk [vmem:[#allocation3 + $0x38] sm:$0xff] %vm1531, %v1522
        %v1540 = vld [vmem:[%s634] sm:$0xe]
        %v1541 = vld [vmem:[%s634 + $0x4] sm:$0xf]
        %v1542 = vld [vmem:[%s634 + $0x8] sm:$0x1]
        %v1543 = vld [vmem:[%s634 + $0xc] sm:$0xe]
        %v1544 = vld [vmem:[%s634 + $0x10] sm:$0xf]
        %v1545 = vld [vmem:[%s634 + $0x14] sm:$0x1]
        %v1546 = vld [vmem:[%s634 + $0x18] sm:$0xe]
        %v1547 = vld [vmem:[%s634 + $0x1c] sm:$0xf]
        %v1548 = vld [vmem:[%s634 + $0x20] sm:$0x1]
        %v1549 = vld [vmem:[%s634 + $0x24] sm:$0xe]
        %v1550 = vld [vmem:[%s634 + $0x28] sm:$0xf]
        %v1551 = vld [vmem:[%s634 + $0x2c] sm:$0x1]
        %v1552 = vld [vmem:[%s634 + $0x30] sm:$0xe]
        %v1553 = vld [vmem:[%s634 + $0x34] sm:$0xf]
        %v1554 = vld [vmem:[%s634 + $0x38] sm:$0x1]
        %v1555 = vld [vmem:[%s634 + $0x3c] sm:$0xe]
        %v1556 = vld [vmem:[%s634 + $0x40] sm:$0xf]
        %v1557 = vld [vmem:[%s634 + $0x44] sm:$0x1]
        %v1558 = vld [vmem:[%s634 + $0x48] sm:$0xe]
        %v1559 = vld [vmem:[%s634 + $0x4c] sm:$0xf]
        %v1560 = vld [vmem:[%s634 + $0x50] sm:$0x1]
        %v1561 = vld [vmem:[%s634 + $0x54] sm:$0xe]
        %v1562 = vld [vmem:[%s634 + $0x58] sm:$0xf]
        %v1563 = vld [vmem:[%s634 + $0x5c] sm:$0x1]
        %v1588 = vunpack.c.l.b16 %v1540
        %v1589 = vunpack.c.l.b16 %v1541
        %v1590 = vunpack.c.l.b16 %v1542
        %v1591 = vunpack.c.l.b16 %v1543
        %v1592 = vunpack.c.l.b16 %v1544
        %v1593 = vunpack.c.l.b16 %v1545
        %v1594 = vunpack.c.l.b16 %v1546
        %v1595 = vunpack.c.l.b16 %v1547
        %v1596 = vunpack.c.l.b16 %v1548
        %v1597 = vunpack.c.l.b16 %v1549
        %v1598 = vunpack.c.l.b16 %v1550
        %v1599 = vunpack.c.l.b16 %v1551
        %v1600 = vunpack.c.l.b16 %v1552
        %v1601 = vunpack.c.l.b16 %v1553
        %v1602 = vunpack.c.l.b16 %v1554
        %v1603 = vunpack.c.l.b16 %v1555
        %v1604 = vunpack.c.l.b16 %v1556
        %v1605 = vunpack.c.l.b16 %v1557
        %v1606 = vunpack.c.l.b16 %v1558
        %v1607 = vunpack.c.l.b16 %v1559
        %v1608 = vunpack.c.l.b16 %v1560
        %v1609 = vunpack.c.l.b16 %v1561
        %v1610 = vunpack.c.l.b16 %v1562
        %v1611 = vunpack.c.l.b16 %v1563
        %v1612 = vpack.c.b16 %v1589, %v1588
        %v1613 = vpack.c.b16 %v1590, %v1590
        %v1614 = vpack.c.b16 %v1592, %v1591
        %v1615 = vpack.c.b16 %v1593, %v1593
        %v1616 = vpack.c.b16 %v1595, %v1594
        %v1617 = vpack.c.b16 %v1596, %v1596
        %v1618 = vpack.c.b16 %v1598, %v1597
        %v1619 = vpack.c.b16 %v1599, %v1599
        %v1620 = vpack.c.b16 %v1601, %v1600
        %v1621 = vpack.c.b16 %v1602, %v1602
        %v1622 = vpack.c.b16 %v1604, %v1603
        %v1623 = vpack.c.b16 %v1605, %v1605
        %v1624 = vpack.c.b16 %v1607, %v1606
        %v1625 = vpack.c.b16 %v1608, %v1608
        %v1626 = vpack.c.b16 %v1610, %v1609
        %v1627 = vpack.c.b16 %v1611, %v1611
        %v1628 = vrot.slane %v1612, 1
        %v1629 = vrot.slane %v1613, 1
        %v1630 = vsel %vm1176, %v1628, %v1629
        %v1631 = vrot.slane %v1614, 1
        %v1632 = vrot.slane %v1615, 1
        %v1633 = vsel %vm1176, %v1631, %v1632
        %v1634 = vrot.slane %v1616, 1
        %v1635 = vrot.slane %v1617, 1
        %v1636 = vsel %vm1176, %v1634, %v1635
        %v1637 = vrot.slane %v1618, 1
        %v1638 = vrot.slane %v1619, 1
        %v1639 = vsel %vm1176, %v1637, %v1638
        %v1640 = vrot.slane %v1620, 1
        %v1641 = vrot.slane %v1621, 1
        %v1642 = vsel %vm1176, %v1640, %v1641
        %v1643 = vrot.slane %v1622, 1
        %v1644 = vrot.slane %v1623, 1
        %v1645 = vsel %vm1176, %v1643, %v1644
        %v1646 = vrot.slane %v1624, 1
        %v1647 = vrot.slane %v1625, 1
        %v1648 = vsel %vm1176, %v1646, %v1647
        %v1649 = vrot.slane %v1626, 1
        %v1650 = vrot.slane %v1627, 1
        %v1651 = vsel %vm1176, %v1649, %v1650
        %1652 = vrot.lane.b32.xlu0 %v1630, 20
        %v1653 = vpop.permute.xlu0 %1652
        %1654 = vrot.lane.b32.xlu0 %v1633, 20
        %v1655 = vpop.permute.xlu0 %1654
        %1656 = vrot.lane.b32.xlu0 %v1636, 20
        %v1657 = vpop.permute.xlu0 %1656
        %1658 = vrot.lane.b32.xlu0 %v1639, 20
        %v1659 = vpop.permute.xlu0 %1658
        %1660 = vrot.lane.b32.xlu0 %v1642, 20
        %v1661 = vpop.permute.xlu0 %1660
        %1662 = vrot.lane.b32.xlu0 %v1645, 20
        %v1663 = vpop.permute.xlu0 %1662
        %1664 = vrot.lane.b32.xlu0 %v1648, 20
        %v1665 = vpop.permute.xlu0 %1664
        %1666 = vrot.lane.b32.xlu0 %v1651, 20
        %v1667 = vpop.permute.xlu0 %1666
        %vm1676 = vcmask 195744
        %1677 = vst.msk [vmem:[#allocation3] sm:$0xff] %vm1676, %v1653
        %1678 = vst.msk [vmem:[#allocation3 + $0x8] sm:$0xff] %vm1676, %v1655
        %1679 = vst.msk [vmem:[#allocation3 + $0x10] sm:$0xff] %vm1676, %v1657
        %1680 = vst.msk [vmem:[#allocation3 + $0x18] sm:$0xff] %vm1676, %v1659
        %1681 = vst.msk [vmem:[#allocation3 + $0x20] sm:$0xff] %vm1676, %v1661
        %1682 = vst.msk [vmem:[#allocation3 + $0x28] sm:$0xff] %vm1676, %v1663
        %1683 = vst.msk [vmem:[#allocation3 + $0x30] sm:$0xff] %vm1676, %v1665
        %1684 = vst.msk [vmem:[#allocation3 + $0x38] sm:$0xff] %vm1676, %v1667
        %s1685 = scalar_lea.vmem [#allocation2], 24
        %v1686 = vld [vmem:[%s1685] sm:$0xf]
        %v1687 = vld [vmem:[%s1685 + $0x4] sm:$0xf]
        %v1688 = vld [vmem:[%s1685 + $0xc] sm:$0xf]
        %v1689 = vld [vmem:[%s1685 + $0x10] sm:$0xf]
        %v1690 = vld [vmem:[%s1685 + $0x18] sm:$0xf]
        %v1691 = vld [vmem:[%s1685 + $0x1c] sm:$0xf]
        %v1692 = vld [vmem:[%s1685 + $0x24] sm:$0xf]
        %v1693 = vld [vmem:[%s1685 + $0x28] sm:$0xf]
        %v1694 = vld [vmem:[%s1685 + $0x30] sm:$0xf]
        %v1695 = vld [vmem:[%s1685 + $0x34] sm:$0xf]
        %v1696 = vld [vmem:[%s1685 + $0x3c] sm:$0xf]
        %v1697 = vld [vmem:[%s1685 + $0x40] sm:$0xf]
        %v1698 = vld [vmem:[%s1685 + $0x48] sm:$0xf]
        %v1699 = vld [vmem:[%s1685 + $0x4c] sm:$0xf]
        %v1700 = vld [vmem:[%s1685 + $0x54] sm:$0xf]
        %v1701 = vld [vmem:[%s1685 + $0x58] sm:$0xf]
        %v1718 = vunpack.c.l.b16 %v1686
        %v1719 = vunpack.c.l.b16 %v1687
        %v1720 = vunpack.c.l.b16 %v1688
        %v1721 = vunpack.c.l.b16 %v1689
        %v1722 = vunpack.c.l.b16 %v1690
        %v1723 = vunpack.c.l.b16 %v1691
        %v1724 = vunpack.c.l.b16 %v1692
        %v1725 = vunpack.c.l.b16 %v1693
        %v1726 = vunpack.c.l.b16 %v1694
        %v1727 = vunpack.c.l.b16 %v1695
        %v1728 = vunpack.c.l.b16 %v1696
        %v1729 = vunpack.c.l.b16 %v1697
        %v1730 = vunpack.c.l.b16 %v1698
        %v1731 = vunpack.c.l.b16 %v1699
        %v1732 = vunpack.c.l.b16 %v1700
        %v1733 = vunpack.c.l.b16 %v1701
        %v1734 = vpack.c.b16 %v1719, %v1718
        %v1735 = vpack.c.b16 %v1721, %v1720
        %v1736 = vpack.c.b16 %v1723, %v1722
        %v1737 = vpack.c.b16 %v1725, %v1724
        %v1738 = vpack.c.b16 %v1727, %v1726
        %v1739 = vpack.c.b16 %v1729, %v1728
        %v1740 = vpack.c.b16 %v1731, %v1730
        %v1741 = vpack.c.b16 %v1733, %v1732
        %1742 = vrot.lane.b32.xlu0 %v1734, 24
        %v1743 = vpop.permute.xlu0 %1742
        %1744 = vrot.lane.b32.xlu0 %v1735, 24
        %v1745 = vpop.permute.xlu0 %1744
        %1746 = vrot.lane.b32.xlu0 %v1736, 24
        %v1747 = vpop.permute.xlu0 %1746
        %1748 = vrot.lane.b32.xlu0 %v1737, 24
        %v1749 = vpop.permute.xlu0 %1748
        %1750 = vrot.lane.b32.xlu0 %v1738, 24
        %v1751 = vpop.permute.xlu0 %1750
        %1752 = vrot.lane.b32.xlu0 %v1739, 24
        %v1753 = vpop.permute.xlu0 %1752
        %1754 = vrot.lane.b32.xlu0 %v1740, 24
        %v1755 = vpop.permute.xlu0 %1754
        %1756 = vrot.lane.b32.xlu0 %v1741, 24
        %v1757 = vpop.permute.xlu0 %1756
        %vm1766 = vcmask 228544
        %1767 = vst.msk [vmem:[#allocation3] sm:$0xff] %vm1766, %v1743
        %1768 = vst.msk [vmem:[#allocation3 + $0x8] sm:$0xff] %vm1766, %v1745
        %1769 = vst.msk [vmem:[#allocation3 + $0x10] sm:$0xff] %vm1766, %v1747
        %1770 = vst.msk [vmem:[#allocation3 + $0x18] sm:$0xff] %vm1766, %v1749
        %1771 = vst.msk [vmem:[#allocation3 + $0x20] sm:$0xff] %vm1766, %v1751
        %1772 = vst.msk [vmem:[#allocation3 + $0x28] sm:$0xff] %vm1766, %v1753
        %1773 = vst.msk [vmem:[#allocation3 + $0x30] sm:$0xff] %vm1766, %v1755
        %1774 = vst.msk [vmem:[#allocation3 + $0x38] sm:$0xff] %vm1766, %v1757
        %v1775 = vld [vmem:[%s1685] sm:$0xf]
        %v1776 = vld [vmem:[%s1685 + $0x4] sm:$0xf]
        %v1777 = vld [vmem:[%s1685 + $0x8] sm:$0x1]
        %v1778 = vld [vmem:[%s1685 + $0xc] sm:$0xf]
        %v1779 = vld [vmem:[%s1685 + $0x10] sm:$0xf]
        %v1780 = vld [vmem:[%s1685 + $0x14] sm:$0x1]
        %v1781 = vld [vmem:[%s1685 + $0x18] sm:$0xf]
        %v1782 = vld [vmem:[%s1685 + $0x1c] sm:$0xf]
        %v1783 = vld [vmem:[%s1685 + $0x20] sm:$0x1]
        %v1784 = vld [vmem:[%s1685 + $0x24] sm:$0xf]
        %v1785 = vld [vmem:[%s1685 + $0x28] sm:$0xf]
        %v1786 = vld [vmem:[%s1685 + $0x2c] sm:$0x1]
        %v1787 = vld [vmem:[%s1685 + $0x30] sm:$0xf]
        %v1788 = vld [vmem:[%s1685 + $0x34] sm:$0xf]
        %v1789 = vld [vmem:[%s1685 + $0x38] sm:$0x1]
        %v1790 = vld [vmem:[%s1685 + $0x3c] sm:$0xf]
        %v1791 = vld [vmem:[%s1685 + $0x40] sm:$0xf]
        %v1792 = vld [vmem:[%s1685 + $0x44] sm:$0x1]
        %v1793 = vld [vmem:[%s1685 + $0x48] sm:$0xf]
        %v1794 = vld [vmem:[%s1685 + $0x4c] sm:$0xf]
        %v1795 = vld [vmem:[%s1685 + $0x50] sm:$0x1]
        %v1796 = vld [vmem:[%s1685 + $0x54] sm:$0xf]
        %v1797 = vld [vmem:[%s1685 + $0x58] sm:$0xf]
        %v1798 = vld [vmem:[%s1685 + $0x5c] sm:$0x1]
        %v1823 = vunpack.c.l.b16 %v1775
        %v1824 = vunpack.c.l.b16 %v1776
        %v1825 = vunpack.c.l.b16 %v1777
        %v1826 = vunpack.c.l.b16 %v1778
        %v1827 = vunpack.c.l.b16 %v1779
        %v1828 = vunpack.c.l.b16 %v1780
        %v1829 = vunpack.c.l.b16 %v1781
        %v1830 = vunpack.c.l.b16 %v1782
        %v1831 = vunpack.c.l.b16 %v1783
        %v1832 = vunpack.c.l.b16 %v1784
        %v1833 = vunpack.c.l.b16 %v1785
        %v1834 = vunpack.c.l.b16 %v1786
        %v1835 = vunpack.c.l.b16 %v1787
        %v1836 = vunpack.c.l.b16 %v1788
        %v1837 = vunpack.c.l.b16 %v1789
        %v1838 = vunpack.c.l.b16 %v1790
        %v1839 = vunpack.c.l.b16 %v1791
        %v1840 = vunpack.c.l.b16 %v1792
        %v1841 = vunpack.c.l.b16 %v1793
        %v1842 = vunpack.c.l.b16 %v1794
        %v1843 = vunpack.c.l.b16 %v1795
        %v1844 = vunpack.c.l.b16 %v1796
        %v1845 = vunpack.c.l.b16 %v1797
        %v1846 = vunpack.c.l.b16 %v1798
        %v1847 = vpack.c.b16 %v1824, %v1823
        %v1848 = vpack.c.b16 %v1825, %v1825
        %v1849 = vpack.c.b16 %v1827, %v1826
        %v1850 = vpack.c.b16 %v1828, %v1828
        %v1851 = vpack.c.b16 %v1830, %v1829
        %v1852 = vpack.c.b16 %v1831, %v1831
        %v1853 = vpack.c.b16 %v1833, %v1832
        %v1854 = vpack.c.b16 %v1834, %v1834
        %v1855 = vpack.c.b16 %v1836, %v1835
        %v1856 = vpack.c.b16 %v1837, %v1837
        %v1857 = vpack.c.b16 %v1839, %v1838
        %v1858 = vpack.c.b16 %v1840, %v1840
        %v1859 = vpack.c.b16 %v1842, %v1841
        %v1860 = vpack.c.b16 %v1843, %v1843
        %v1861 = vpack.c.b16 %v1845, %v1844
        %v1862 = vpack.c.b16 %v1846, %v1846
        %v1864 = vshrl.u32 %v1847, 16
        %v1866 = vshll.u32 %v1847, 16
        %v1868 = vrot.slane %v1866, 1
        %v1869 = vor.u32 %v1864, %v1868
        %v1871 = vshll.u32 %v1848, 16
        %v1873 = vrot.slane %v1871, 1
        %v1874 = vsel %vm958, %v1869, %v1873
        %v1876 = vshrl.u32 %v1849, 16
        %v1878 = vshll.u32 %v1849, 16
        %v1880 = vrot.slane %v1878, 1
        %v1881 = vor.u32 %v1876, %v1880
        %v1883 = vshll.u32 %v1850, 16
        %v1885 = vrot.slane %v1883, 1
        %v1886 = vsel %vm958, %v1881, %v1885
        %v1888 = vshrl.u32 %v1851, 16
        %v1890 = vshll.u32 %v1851, 16
        %v1892 = vrot.slane %v1890, 1
        %v1893 = vor.u32 %v1888, %v1892
        %v1895 = vshll.u32 %v1852, 16
        %v1897 = vrot.slane %v1895, 1
        %v1898 = vsel %vm958, %v1893, %v1897
        %v1900 = vshrl.u32 %v1853, 16
        %v1902 = vshll.u32 %v1853, 16
        %v1904 = vrot.slane %v1902, 1
        %v1905 = vor.u32 %v1900, %v1904
        %v1907 = vshll.u32 %v1854, 16
        %v1909 = vrot.slane %v1907, 1
        %v1910 = vsel %vm958, %v1905, %v1909
        %v1912 = vshrl.u32 %v1855, 16
        %v1914 = vshll.u32 %v1855, 16
        %v1916 = vrot.slane %v1914, 1
        %v1917 = vor.u32 %v1912, %v1916
        %v1919 = vshll.u32 %v1856, 16
        %v1921 = vrot.slane %v1919, 1
        %v1922 = vsel %vm958, %v1917, %v1921
        %v1924 = vshrl.u32 %v1857, 16
        %v1926 = vshll.u32 %v1857, 16
        %v1928 = vrot.slane %v1926, 1
        %v1929 = vor.u32 %v1924, %v1928
        %v1931 = vshll.u32 %v1858, 16
        %v1933 = vrot.slane %v1931, 1
        %v1934 = vsel %vm958, %v1929, %v1933
        %v1936 = vshrl.u32 %v1859, 16
        %v1938 = vshll.u32 %v1859, 16
        %v1940 = vrot.slane %v1938, 1
        %v1941 = vor.u32 %v1936, %v1940
        %v1943 = vshll.u32 %v1860, 16
        %v1945 = vrot.slane %v1943, 1
        %v1946 = vsel %vm958, %v1941, %v1945
        %v1948 = vshrl.u32 %v1861, 16
        %v1950 = vshll.u32 %v1861, 16
        %v1952 = vrot.slane %v1950, 1
        %v1953 = vor.u32 %v1948, %v1952
        %v1955 = vshll.u32 %v1862, 16
        %v1957 = vrot.slane %v1955, 1
        %v1958 = vsel %vm958, %v1953, %v1957
        %1959 = vrot.lane.b32.xlu0 %v1874, 28
        %v1960 = vpop.permute.xlu0 %1959
        %1961 = vrot.lane.b32.xlu0 %v1886, 28
        %v1962 = vpop.permute.xlu0 %1961
        %1963 = vrot.lane.b32.xlu0 %v1898, 28
        %v1964 = vpop.permute.xlu0 %1963
        %1965 = vrot.lane.b32.xlu0 %v1910, 28
        %v1966 = vpop.permute.xlu0 %1965
        %1967 = vrot.lane.b32.xlu0 %v1922, 28
        %v1968 = vpop.permute.xlu0 %1967
        %1969 = vrot.lane.b32.xlu0 %v1934, 28
        %v1970 = vpop.permute.xlu0 %1969
        %1971 = vrot.lane.b32.xlu0 %v1946, 28
        %v1972 = vpop.permute.xlu0 %1971
        %1973 = vrot.lane.b32.xlu0 %v1958, 28
        %v1974 = vpop.permute.xlu0 %1973
        %vm1983 = vcmask 261344
        %1984 = vst.msk [vmem:[#allocation3] sm:$0xff] %vm1983, %v1960
        %1985 = vst.msk [vmem:[#allocation3 + $0x8] sm:$0xff] %vm1983, %v1962
        %1986 = vst.msk [vmem:[#allocation3 + $0x10] sm:$0xff] %vm1983, %v1964
        %1987 = vst.msk [vmem:[#allocation3 + $0x18] sm:$0xff] %vm1983, %v1966
        %1988 = vst.msk [vmem:[#allocation3 + $0x20] sm:$0xff] %vm1983, %v1968
        %1989 = vst.msk [vmem:[#allocation3 + $0x28] sm:$0xff] %vm1983, %v1970
        %1990 = vst.msk [vmem:[#allocation3 + $0x30] sm:$0xff] %vm1983, %v1972
        %1991 = vst.msk [vmem:[#allocation3 + $0x38] sm:$0xff] %vm1983, %v1974
        %v1992 = vld [vmem:[%s1685] sm:$0xe]
        %v1993 = vld [vmem:[%s1685 + $0x4] sm:$0xf]
        %v1994 = vld [vmem:[%s1685 + $0x8] sm:$0x1]
        %v1995 = vld [vmem:[%s1685 + $0xc] sm:$0xe]
        %v1996 = vld [vmem:[%s1685 + $0x10] sm:$0xf]
        %v1997 = vld [vmem:[%s1685 + $0x14] sm:$0x1]
        %v1998 = vld [vmem:[%s1685 + $0x18] sm:$0xe]
        %v1999 = vld [vmem:[%s1685 + $0x1c] sm:$0xf]
        %v2000 = vld [vmem:[%s1685 + $0x20] sm:$0x1]
        %v2001 = vld [vmem:[%s1685 + $0x24] sm:$0xe]
        %v2002 = vld [vmem:[%s1685 + $0x28] sm:$0xf]
        %v2003 = vld [vmem:[%s1685 + $0x2c] sm:$0x1]
        %v2004 = vld [vmem:[%s1685 + $0x30] sm:$0xe]
        %v2005 = vld [vmem:[%s1685 + $0x34] sm:$0xf]
        %v2006 = vld [vmem:[%s1685 + $0x38] sm:$0x1]
        %v2007 = vld [vmem:[%s1685 + $0x3c] sm:$0xe]
        %v2008 = vld [vmem:[%s1685 + $0x40] sm:$0xf]
        %v2009 = vld [vmem:[%s1685 + $0x44] sm:$0x1]
        %v2010 = vld [vmem:[%s1685 + $0x48] sm:$0xe]
        %v2011 = vld [vmem:[%s1685 + $0x4c] sm:$0xf]
        %v2012 = vld [vmem:[%s1685 + $0x50] sm:$0x1]
        %v2013 = vld [vmem:[%s1685 + $0x54] sm:$0xe]
        %v2014 = vld [vmem:[%s1685 + $0x58] sm:$0xf]
        %v2015 = vld [vmem:[%s1685 + $0x5c] sm:$0x1]
        %v2040 = vunpack.c.l.b16 %v1992
        %v2041 = vunpack.c.l.b16 %v1993
        %v2042 = vunpack.c.l.b16 %v1994
        %v2043 = vunpack.c.l.b16 %v1995
        %v2044 = vunpack.c.l.b16 %v1996
        %v2045 = vunpack.c.l.b16 %v1997
        %v2046 = vunpack.c.l.b16 %v1998
        %v2047 = vunpack.c.l.b16 %v1999
        %v2048 = vunpack.c.l.b16 %v2000
        %v2049 = vunpack.c.l.b16 %v2001
        %v2050 = vunpack.c.l.b16 %v2002
        %v2051 = vunpack.c.l.b16 %v2003
        %v2052 = vunpack.c.l.b16 %v2004
        %v2053 = vunpack.c.l.b16 %v2005
        %v2054 = vunpack.c.l.b16 %v2006
        %v2055 = vunpack.c.l.b16 %v2007
        %v2056 = vunpack.c.l.b16 %v2008
        %v2057 = vunpack.c.l.b16 %v2009
        %v2058 = vunpack.c.l.b16 %v2010
        %v2059 = vunpack.c.l.b16 %v2011
        %v2060 = vunpack.c.l.b16 %v2012
        %v2061 = vunpack.c.l.b16 %v2013
        %v2062 = vunpack.c.l.b16 %v2014
        %v2063 = vunpack.c.l.b16 %v2015
        %v2064 = vpack.c.b16 %v2041, %v2040
        %v2065 = vpack.c.b16 %v2042, %v2042
        %v2066 = vpack.c.b16 %v2044, %v2043
        %v2067 = vpack.c.b16 %v2045, %v2045
        %v2068 = vpack.c.b16 %v2047, %v2046
        %v2069 = vpack.c.b16 %v2048, %v2048
        %v2070 = vpack.c.b16 %v2050, %v2049
        %v2071 = vpack.c.b16 %v2051, %v2051
        %v2072 = vpack.c.b16 %v2053, %v2052
        %v2073 = vpack.c.b16 %v2054, %v2054
        %v2074 = vpack.c.b16 %v2056, %v2055
        %v2075 = vpack.c.b16 %v2057, %v2057
        %v2076 = vpack.c.b16 %v2059, %v2058
        %v2077 = vpack.c.b16 %v2060, %v2060
        %v2078 = vpack.c.b16 %v2062, %v2061
        %v2079 = vpack.c.b16 %v2063, %v2063
        %v2080 = vrot.slane %v2064, 1
        %v2081 = vrot.slane %v2065, 1
        %v2082 = vsel %vm1176, %v2080, %v2081
        %v2083 = vrot.slane %v2066, 1
        %v2084 = vrot.slane %v2067, 1
        %v2085 = vsel %vm1176, %v2083, %v2084
        %v2086 = vrot.slane %v2068, 1
        %v2087 = vrot.slane %v2069, 1
        %v2088 = vsel %vm1176, %v2086, %v2087
        %v2089 = vrot.slane %v2070, 1
        %v2090 = vrot.slane %v2071, 1
        %v2091 = vsel %vm1176, %v2089, %v2090
        %v2092 = vrot.slane %v2072, 1
        %v2093 = vrot.slane %v2073, 1
        %v2094 = vsel %vm1176, %v2092, %v2093
        %v2095 = vrot.slane %v2074, 1
        %v2096 = vrot.slane %v2075, 1
        %v2097 = vsel %vm1176, %v2095, %v2096
        %v2098 = vrot.slane %v2076, 1
        %v2099 = vrot.slane %v2077, 1
        %v2100 = vsel %vm1176, %v2098, %v2099
        %v2101 = vrot.slane %v2078, 1
        %v2102 = vrot.slane %v2079, 1
        %v2103 = vsel %vm1176, %v2101, %v2102
        %2104 = vrot.lane.b32.xlu0 %v2082, 32
        %v2105 = vpop.permute.xlu0 %2104
        %2106 = vrot.lane.b32.xlu0 %v2085, 32
        %v2107 = vpop.permute.xlu0 %2106
        %2108 = vrot.lane.b32.xlu0 %v2088, 32
        %v2109 = vpop.permute.xlu0 %2108
        %2110 = vrot.lane.b32.xlu0 %v2091, 32
        %v2111 = vpop.permute.xlu0 %2110
        %2112 = vrot.lane.b32.xlu0 %v2094, 32
        %v2113 = vpop.permute.xlu0 %2112
        %2114 = vrot.lane.b32.xlu0 %v2097, 32
        %v2115 = vpop.permute.xlu0 %2114
        %2116 = vrot.lane.b32.xlu0 %v2100, 32
        %v2117 = vpop.permute.xlu0 %2116
        %2118 = vrot.lane.b32.xlu0 %v2103, 32
        %v2119 = vpop.permute.xlu0 %2118
        %vm2128 = vcmask 294144
        %2129 = vst.msk [vmem:[#allocation3] sm:$0xff] %vm2128, %v2105
        %2130 = vst.msk [vmem:[#allocation3 + $0x8] sm:$0xff] %vm2128, %v2107
        %2131 = vst.msk [vmem:[#allocation3 + $0x10] sm:$0xff] %vm2128, %v2109
        %2132 = vst.msk [vmem:[#allocation3 + $0x18] sm:$0xff] %vm2128, %v2111
        %2133 = vst.msk [vmem:[#allocation3 + $0x20] sm:$0xff] %vm2128, %v2113
        %2134 = vst.msk [vmem:[#allocation3 + $0x28] sm:$0xff] %vm2128, %v2115
        %2135 = vst.msk [vmem:[#allocation3 + $0x30] sm:$0xff] %vm2128, %v2117
        %2136 = vst.msk [vmem:[#allocation3 + $0x38] sm:$0xff] %vm2128, %v2119
        %v2137 = vld [vmem:[#allocation3] sm:$0xff]
        %v2138 = vld [vmem:[#allocation3 + $0x8] sm:$0xff]
        %v2139 = vld [vmem:[#allocation3 + $0x10] sm:$0xff]
        %v2140 = vld [vmem:[#allocation3 + $0x18] sm:$0xff]
        %v2141 = vld [vmem:[#allocation3 + $0x20] sm:$0xff]
        %v2142 = vld [vmem:[#allocation3 + $0x28] sm:$0xff]
        %v2143 = vld [vmem:[#allocation3 + $0x30] sm:$0xff]
        %v2144 = vld [vmem:[#allocation3 + $0x38] sm:$0xff]
        %s2145 = smul.u32 %s26, 16
        %s2146 = smul.addr %s2145, 4
        %s2147 = scalar_lea.vmem %s3, %s2146
        %v2148 = vld [vmem:[%s2147] sm:$0xf]
        %v2149 = vld [vmem:[%s2147 + $0x4] sm:$0xf]
        %v2150 = vld [vmem:[%s2147 + $0x8] sm:$0xf]
        %v2151 = vld [vmem:[%s2147 + $0xc] sm:$0xf]
        %v2152 = vld [vmem:[%s2147 + $0x10] sm:$0xf]
        %v2153 = vld [vmem:[%s2147 + $0x14] sm:$0xf]
        %v2154 = vld [vmem:[%s2147 + $0x18] sm:$0xf]
        %v2155 = vld [vmem:[%s2147 + $0x1c] sm:$0xf]
        %v2156 = vld [vmem:[%s2147 + $0x20] sm:$0xf]
        %v2157 = vld [vmem:[%s2147 + $0x24] sm:$0xf]
        %v2158 = vld [vmem:[%s2147 + $0x28] sm:$0xf]
        %v2159 = vld [vmem:[%s2147 + $0x2c] sm:$0xf]
        %v2160 = vld [vmem:[%s2147 + $0x30] sm:$0xf]
        %v2161 = vld [vmem:[%s2147 + $0x34] sm:$0xf]
        %v2162 = vld [vmem:[%s2147 + $0x38] sm:$0xf]
        %v2163 = vld [vmem:[%s2147 + $0x3c] sm:$0xf]
        %s2164 = scalar_lea.vmem %s4, %s26
        %v2165 = vld [vmem:[%s2164] sm:$0x1]
        %v2167 = vlaneseq
        %v2168 = vshrl.u32 %v2167, 7
        %v2169 = vsub.s32 0, %v2168
        %v2170 = vrot.slane %v2165, %v2169
        %v2188 = vunpack.c.l.b16 %v2148
        %v2189 = vunpack.c.l.b16 %v2149
        %v2190 = vunpack.c.l.b16 %v2150
        %v2191 = vunpack.c.l.b16 %v2151
        %v2192 = vunpack.c.l.b16 %v2152
        %v2193 = vunpack.c.l.b16 %v2153
        %v2194 = vunpack.c.l.b16 %v2154
        %v2195 = vunpack.c.l.b16 %v2155
        %v2196 = vunpack.c.l.b16 %v2156
        %v2197 = vunpack.c.l.b16 %v2157
        %v2198 = vunpack.c.l.b16 %v2158
        %v2199 = vunpack.c.l.b16 %v2159
        %v2200 = vunpack.c.l.b16 %v2160
        %v2201 = vunpack.c.l.b16 %v2161
        %v2202 = vunpack.c.l.b16 %v2162
        %v2203 = vunpack.c.l.b16 %v2163
        %v2204 = vpack.c.b16 %v2189, %v2188
        %v2205 = vpack.c.b16 %v2191, %v2190
        %v2206 = vpack.c.b16 %v2193, %v2192
        %v2207 = vpack.c.b16 %v2195, %v2194
        %v2208 = vpack.c.b16 %v2197, %v2196
        %v2209 = vpack.c.b16 %v2199, %v2198
        %v2210 = vpack.c.b16 %v2201, %v2200
        %v2211 = vpack.c.b16 %v2203, %v2202
        %2220 = vmatprep.subr.bf16.mxu0 0
        %2221 = vmatpush1.bf16.msra.mxu0 %v2204
        %2222 = vmatprep.subr.bf16.mxu0 0
        %2223 = vmatpush1.bf16.msra.mxu0 %v2205
        %2224 = vmatprep.subr.bf16.mxu0 0
        %2225 = vmatpush1.bf16.msra.mxu0 %v2206
        %2226 = vmatprep.subr.bf16.mxu0 0
        %2227 = vmatpush1.bf16.msra.mxu0 %v2207
        %2228 = vmatprep.subr.bf16.mxu0 0
        %2229 = vmatpush1.bf16.msra.mxu0 %v2208
        %2230 = vmatprep.subr.bf16.mxu0 0
        %2231 = vmatpush1.bf16.msra.mxu0 %v2209
        %2232 = vmatprep.subr.bf16.mxu0 0
        %2233 = vmatpush1.bf16.msra.mxu0 %v2210
        %2234 = vmatprep.subr.bf16.mxu0 0
        %2235 = vmatpush1.bf16.msra.mxu0 %v2211
        %2236 = vmatprep.subr.bf16.mxu0 0
        %2237 = vmatpush1.bf16.msra.mxu0 0
        %2238 = vmatprep.subr.bf16.mxu0 0
        %2239 = vmatpush1.bf16.msra.mxu0 0
        %2240 = vmatprep.subr.bf16.mxu0 0
        %2241 = vmatpush1.bf16.msra.mxu0 0
        %2242 = vmatprep.subr.bf16.mxu0 0
        %2243 = vmatpush1.bf16.msra.mxu0 0
        %2244 = vmatprep.subr.bf16.mxu0 0
        %2245 = vmatpush1.bf16.msra.mxu0 0
        %2246 = vmatprep.subr.bf16.mxu0 0
        %2247 = vmatpush1.bf16.msra.mxu0 0
        %2248 = vmatprep.subr.bf16.mxu0 0
        %2249 = vmatpush1.bf16.msra.mxu0 0
        %2250 = vmatprep.subr.bf16.mxu0 0
        %2251 = vmatpush1.bf16.msra.mxu0 0
        %2252 = vmatprep.mubr.bf16.mxu0 0
        %2253 = vmatmul.mubr.bf16.gmra.mrb[0].mxu0 %v2137
        %v2254 = vpop.f32.mrb[0].mxu0
        %v2255 = vadd.f32 %v2170, %v2254
        %v2256 = vpop.f32.mrb[0].mxu0
        %v2257 = vpop.f32.mrb[0].mxu0
        %v2258 = vadd.f32 %v2170, %v2257
        %v2259 = vpop.f32.mrb[0].mxu0
        %2260 = vmatprep.mubr.bf16.mxu0 0
        %2261 = vmatmul.mubr.bf16.gmra.mrb[0].mxu0 %v2138
        %v2262 = vpop.f32.mrb[0].mxu0
        %v2263 = vadd.f32 %v2170, %v2262
        %v2264 = vpop.f32.mrb[0].mxu0
        %v2265 = vpop.f32.mrb[0].mxu0
        %v2266 = vadd.f32 %v2170, %v2265
        %v2267 = vpop.f32.mrb[0].mxu0
        %2268 = vmatprep.mubr.bf16.mxu0 0
        %2269 = vmatmul.mubr.bf16.gmra.mrb[0].mxu0 %v2139
        %v2270 = vpop.f32.mrb[0].mxu0
        %v2271 = vadd.f32 %v2170, %v2270
        %v2272 = vpop.f32.mrb[0].mxu0
        %v2273 = vpop.f32.mrb[0].mxu0
        %v2274 = vadd.f32 %v2170, %v2273
        %v2275 = vpop.f32.mrb[0].mxu0
        %2276 = vmatprep.mubr.bf16.mxu0 0
        %2277 = vmatmul.mubr.bf16.gmra.mrb[0].mxu0 %v2140
        %v2278 = vpop.f32.mrb[0].mxu0
        %v2279 = vadd.f32 %v2170, %v2278
        %v2280 = vpop.f32.mrb[0].mxu0
        %v2281 = vpop.f32.mrb[0].mxu0
        %v2282 = vadd.f32 %v2170, %v2281
        %v2283 = vpop.f32.mrb[0].mxu0
        %2284 = vmatprep.mubr.bf16.mxu0 0
        %2285 = vmatmul.mubr.bf16.gmra.mrb[0].mxu0 %v2141
        %v2286 = vpop.f32.mrb[0].mxu0
        %v2287 = vadd.f32 %v2170, %v2286
        %v2288 = vpop.f32.mrb[0].mxu0
        %v2289 = vpop.f32.mrb[0].mxu0
        %v2290 = vadd.f32 %v2170, %v2289
        %v2291 = vpop.f32.mrb[0].mxu0
        %2292 = vmatprep.mubr.bf16.mxu0 0
        %2293 = vmatmul.mubr.bf16.gmra.mrb[0].mxu0 %v2142
        %v2294 = vpop.f32.mrb[0].mxu0
        %v2295 = vadd.f32 %v2170, %v2294
        %v2296 = vpop.f32.mrb[0].mxu0
        %v2297 = vpop.f32.mrb[0].mxu0
        %v2298 = vadd.f32 %v2170, %v2297
        %v2299 = vpop.f32.mrb[0].mxu0
        %2300 = vmatprep.mubr.bf16.mxu0 0
        %2301 = vmatmul.mubr.bf16.gmra.mrb[0].mxu0 %v2143
        %v2302 = vpop.f32.mrb[0].mxu0
        %v2303 = vadd.f32 %v2170, %v2302
        %v2304 = vpop.f32.mrb[0].mxu0
        %v2305 = vpop.f32.mrb[0].mxu0
        %v2306 = vadd.f32 %v2170, %v2305
        %v2307 = vpop.f32.mrb[0].mxu0
        %2308 = vmatprep.mubr.bf16.mxu0 0
        %2309 = vmatmul.mubr.bf16.gmra.mrb[0].mxu0 %v2144
        %v2310 = vpop.f32.mrb[0].mxu0
        %v2311 = vadd.f32 %v2170, %v2310
        %v2312 = vpop.f32.mrb[0].mxu0
        %v2313 = vpop.f32.mrb[0].mxu0
        %v2314 = vadd.f32 %v2170, %v2313
        %v2315 = vpop.f32.mrb[0].mxu0
        %2316 = vdwg.mxu0
        %v2317 = vsub.f32 0.0, %v2255
        %v2318 = vsub.f32 0.0, %v2258
        %v2319 = vsub.f32 0.0, %v2263
        %v2320 = vsub.f32 0.0, %v2266
        %v2321 = vsub.f32 0.0, %v2271
        %v2322 = vsub.f32 0.0, %v2274
        %v2323 = vsub.f32 0.0, %v2279
        %v2324 = vsub.f32 0.0, %v2282
        %v2325 = vsub.f32 0.0, %v2287
        %v2326 = vsub.f32 0.0, %v2290
        %v2327 = vsub.f32 0.0, %v2295
        %v2328 = vsub.f32 0.0, %v2298
        %v2329 = vsub.f32 0.0, %v2303
        %v2330 = vsub.f32 0.0, %v2306
        %v2331 = vsub.f32 0.0, %v2311
        %v2332 = vsub.f32 0.0, %v2314
        %v2333 = vmul.f32 %v2317, 1.442695
        %v2334 = vpow.pop %v2333
        %v2335 = vmul.f32 %v2318, 1.442695
        %v2336 = vpow.pop %v2335
        %v2337 = vmul.f32 %v2319, 1.442695
        %v2338 = vpow.pop %v2337
        %v2339 = vmul.f32 %v2320, 1.442695
        %v2340 = vpow.pop %v2339
        %v2341 = vmul.f32 %v2321, 1.442695
        %v2342 = vpow.pop %v2341
        %v2343 = vmul.f32 %v2322, 1.442695
        %v2344 = vpow.pop %v2343
        %v2345 = vmul.f32 %v2323, 1.442695
        %v2346 = vpow.pop %v2345
        %v2347 = vmul.f32 %v2324, 1.442695
        %v2348 = vpow.pop %v2347
        %v2349 = vmul.f32 %v2325, 1.442695
        %v2350 = vpow.pop %v2349
        %v2351 = vmul.f32 %v2326, 1.442695
        %v2352 = vpow.pop %v2351
        %v2353 = vmul.f32 %v2327, 1.442695
        %v2354 = vpow.pop %v2353
        %v2355 = vmul.f32 %v2328, 1.442695
        %v2356 = vpow.pop %v2355
        %v2357 = vmul.f32 %v2329, 1.442695
        %v2358 = vpow.pop %v2357
        %v2359 = vmul.f32 %v2330, 1.442695
        %v2360 = vpow.pop %v2359
        %v2361 = vmul.f32 %v2331, 1.442695
        %v2362 = vpow.pop %v2361
        %v2363 = vmul.f32 %v2332, 1.442695
        %v2364 = vpow.pop %v2363
        %v2365 = vadd.f32 %v2334, 1.0
        %v2366 = vadd.f32 %v2336, 1.0
        %v2367 = vadd.f32 %v2338, 1.0
        %v2368 = vadd.f32 %v2340, 1.0
        %v2369 = vadd.f32 %v2342, 1.0
        %v2370 = vadd.f32 %v2344, 1.0
        %v2371 = vadd.f32 %v2346, 1.0
        %v2372 = vadd.f32 %v2348, 1.0
        %v2373 = vadd.f32 %v2350, 1.0
        %v2374 = vadd.f32 %v2352, 1.0
        %v2375 = vadd.f32 %v2354, 1.0
        %v2376 = vadd.f32 %v2356, 1.0
        %v2377 = vadd.f32 %v2358, 1.0
        %v2378 = vadd.f32 %v2360, 1.0
        %v2379 = vadd.f32 %v2362, 1.0
        %v2380 = vadd.f32 %v2364, 1.0
        %v2381 = vrcp.pop %v2365
        %v2382 = vrcp.pop %v2366
        %v2383 = vrcp.pop %v2367
        %v2384 = vrcp.pop %v2368
        %v2385 = vrcp.pop %v2369
        %v2386 = vrcp.pop %v2370
        %v2387 = vrcp.pop %v2371
        %v2388 = vrcp.pop %v2372
        %v2389 = vrcp.pop %v2373
        %v2390 = vrcp.pop %v2374
        %v2391 = vrcp.pop %v2375
        %v2392 = vrcp.pop %v2376
        %v2393 = vrcp.pop %v2377
        %v2394 = vrcp.pop %v2378
        %v2395 = vrcp.pop %v2379
        %v2396 = vrcp.pop %v2380
        %v2397 = vmul.f32 %v2255, %v2381
        %v2398 = vmul.f32 %v2258, %v2382
        %v2399 = vmul.f32 %v2263, %v2383
        %v2400 = vmul.f32 %v2266, %v2384
        %v2401 = vmul.f32 %v2271, %v2385
        %v2402 = vmul.f32 %v2274, %v2386
        %v2403 = vmul.f32 %v2279, %v2387
        %v2404 = vmul.f32 %v2282, %v2388
        %v2405 = vmul.f32 %v2287, %v2389
        %v2406 = vmul.f32 %v2290, %v2390
        %v2407 = vmul.f32 %v2295, %v2391
        %v2408 = vmul.f32 %v2298, %v2392
        %v2409 = vmul.f32 %v2303, %v2393
        %v2410 = vmul.f32 %v2306, %v2394
        %v2411 = vmul.f32 %v2311, %v2395
        %v2412 = vmul.f32 %v2314, %v2396
        %v2413 = vpack.c.bf16 %v2398, %v2397
        %v2414 = vpack.c.bf16 %v2400, %v2399
        %v2415 = vpack.c.bf16 %v2402, %v2401
        %v2416 = vpack.c.bf16 %v2404, %v2403
        %v2417 = vpack.c.bf16 %v2406, %v2405
        %v2418 = vpack.c.bf16 %v2408, %v2407
        %v2419 = vpack.c.bf16 %v2410, %v2409
        %v2420 = vpack.c.bf16 %v2412, %v2411
        %v2429 = vunpack.c.l.b16 %v2413
        %v2430 = vunpack.c.h.b16 %v2413
        %v2431 = vunpack.c.l.b16 %v2414
        %v2432 = vunpack.c.h.b16 %v2414
        %v2433 = vunpack.c.l.b16 %v2415
        %v2434 = vunpack.c.h.b16 %v2415
        %v2435 = vunpack.c.l.b16 %v2416
        %v2436 = vunpack.c.h.b16 %v2416
        %v2437 = vunpack.c.l.b16 %v2417
        %v2438 = vunpack.c.h.b16 %v2417
        %v2439 = vunpack.c.l.b16 %v2418
        %v2440 = vunpack.c.h.b16 %v2418
        %v2441 = vunpack.c.l.b16 %v2419
        %v2442 = vunpack.c.h.b16 %v2419
        %v2443 = vunpack.c.l.b16 %v2420
        %v2444 = vunpack.c.h.b16 %v2420
        %v2445 = vpack.c.b16 %v2429, %v2429
        %v2446 = vpack.c.b16 %v2430, %v2430
        %v2447 = vpack.c.b16 %v2431, %v2431
        %v2448 = vpack.c.b16 %v2432, %v2432
        %v2449 = vpack.c.b16 %v2433, %v2433
        %v2450 = vpack.c.b16 %v2434, %v2434
        %v2451 = vpack.c.b16 %v2435, %v2435
        %v2452 = vpack.c.b16 %v2436, %v2436
        %v2453 = vpack.c.b16 %v2437, %v2437
        %v2454 = vpack.c.b16 %v2438, %v2438
        %v2455 = vpack.c.b16 %v2439, %v2439
        %v2456 = vpack.c.b16 %v2440, %v2440
        %v2457 = vpack.c.b16 %v2441, %v2441
        %v2458 = vpack.c.b16 %v2442, %v2442
        %v2459 = vpack.c.b16 %v2443, %v2443
        %v2460 = vpack.c.b16 %v2444, %v2444
        %2477 = vst [vmem:[%s343] sm:$0xf] %v2445
        %2478 = vst [vmem:[%s343 + $0x4] sm:$0xf] %v2446
        %2479 = vst [vmem:[%s343 + $0x8] sm:$0xf] %v2447
        %2480 = vst [vmem:[%s343 + $0xc] sm:$0xf] %v2448
        %2481 = vst [vmem:[%s343 + $0x10] sm:$0xf] %v2449
        %2482 = vst [vmem:[%s343 + $0x14] sm:$0xf] %v2450
        %2483 = vst [vmem:[%s343 + $0x18] sm:$0xf] %v2451
        %2484 = vst [vmem:[%s343 + $0x1c] sm:$0xf] %v2452
        %2485 = vst [vmem:[%s343 + $0x20] sm:$0xf] %v2453
        %2486 = vst [vmem:[%s343 + $0x24] sm:$0xf] %v2454
        %2487 = vst [vmem:[%s343 + $0x28] sm:$0xf] %v2455
        %2488 = vst [vmem:[%s343 + $0x2c] sm:$0xf] %v2456
        %2489 = vst [vmem:[%s343 + $0x30] sm:$0xf] %v2457
        %2490 = vst [vmem:[%s343 + $0x34] sm:$0xf] %v2458
        %2491 = vst [vmem:[%s343 + $0x38] sm:$0xf] %v2459
        %2492 = vst [vmem:[%s343 + $0x3c] sm:$0xf] %v2460
        %s2493 = sand.u32 %s192, 1
        %s2494 = scalar_lea.sflag [#allocation5], %s2493
        %s2495 = sand.u32 %s192, 1
        %s2496 = smul.addr %s2495, 64
        %s2497 = scalar_lea.vmem [#allocation4], %s2496
        // Predicated region
        $region57: #{tpu_custom_call.1} parent=39 // pred_check
          %p2498 = pneg %p202
        $region58: #{tpu_custom_call.1} parent=39 // pred_check_branch
          %2500 = sbr.rel (%p2498) target = $region60
        $region59: #{tpu_custom_call.1} parent=39 // pred_region
          %s2501 = smul.u32 8, %s25
          %s2503 = ssub.s32 1024, 1024
          %2504 = vsyncadd %s2494, %s2503
          %s2505 = smul.addr %s2501, 2
          %s2506 = sadd.s32 %s26, %s2505
          %s2507 = smul.addr %s24, 32
          %s2508 = sadd.s32 %s2506, %s2507
          %s2509 = smul.addr %s2508, 64
          %s2510 = scalar_lea.hbm %s5, %s2509
          %s2511 = sshll.u32 %s2497, 4
          %s2512 = int_to_ptr.vmem [resolvable:$true] %s2511
          %2517 = dma.vmem_to_hbm [thread:$0]  %s2512, 1024, %s2510, %s2494, 64, 64, 4
        $region60: #{tpu_custom_call.1} parent=39 // pred_fallthru
          _
      $region40: #{tpu_custom_call.1} parent=5 // pred_fallthru
        _
      %p2518 = scmp.le.s32.totalorder 2, %s14
      // Predicated region
      $region61: #{tpu_custom_call.1} parent=5 // pred_check
        %p2519 = pneg %p2518
      $region62: #{tpu_custom_call.1} parent=5 // pred_check_branch
        %2521 = sbr.rel (%p2519) target = $region64
      $region63: #{tpu_custom_call.1} parent=5 // pred_region
        %s2522 = ssub.s32 %s14, 2
        // Predicated region
        $region65: #{tpu_custom_call.1} parent=63 // pred_check
          %p2523 = pneg %p208
        $region66: #{tpu_custom_call.1} parent=63 // pred_check_branch
          %2525 = sbr.rel (%p2523) target = $region68
        $region67: #{tpu_custom_call.1} parent=63 // pred_region
          %s2526 = sand.u32 %s193, 1
          %s2527 = scalar_lea.sflag [#allocation5], %s2526
          %s2528 = sand.u32 %s193, 1
          %s2529 = smul.addr %s2528, 64
          %s2530 = scalar_lea.vmem [#allocation4], %s2529
          %2531 = dma.done %s2527, 1024
        $region68: #{tpu_custom_call.1} parent=63 // pred_fallthru
          _
      $region64: #{tpu_custom_call.1} parent=5 // pred_fallthru
        _
    $region6: #{tpu_custom_call.1} parent=1 // loop_footer
      %s18 = sadd.s32 1, %s14
    $region7: #{tpu_custom_call.1} parent=1 // loop_footer_branch
      %13 = sbr.rel target = $region3
    $region8: #{tpu_custom_call.1} parent=1 // loop_exit
      _
    %2532 = vsyncpa [#allocation5], 1
    %s2533 = scalar_lea.sflag [#allocation5], 1
    %2534 = vsyncpa %s2533, 1

</llo_original>
